<compile_context>
chip_gen: v5e
topology: v5e:2x2
jax: 0.10.0
libtpu: 0.0.40
codegen_flags: <defaults>
</compile_context>

<pallas_src>
import functools
import numpy as np
import jax
import jax.numpy as jnp
from jax import lax
from jax.experimental import pallas as pl
from jax.experimental.pallas import tpu as pltpu


# Row offsets inside the packed conv-parameter slab (must match pack_params).
_BN_S = 0      # 10 BatchNorm scale rows
_BN_T = 10     # 10 BatchNorm shift rows
_C11 = 20      # 6 x 5 rows for the 1x1 convs (masked cyclic-roll partners)
_DW = 50       # 3 blocks x 9 taps for the depthwise 3x3 convs
_NROWS = 77


# ----------------------------------------------------------------------------
# Fused kernel: outer BN + 3x ResConvBlock + last_conv + neck + heads
# ----------------------------------------------------------------------------
def _fused_kernel(x_ref, rows_ref, wlt_ref, mm_ref, mrows_ref, o_ref, *, width):
    H = x_ref.shape[1]
    Wp = x_ref.shape[2]              # padded lane width (multiple of 128)
    M = o_ref.shape[1]               # 3 * bb packed (batch, channel) rows
    W = width                        # spatial width of one channel block
    f32 = jnp.float32

    def row(i):                      # (H, Wp) pre-broadcast conv parameter row
        return rows_ref[i]

    def mrow(i):                     # (M, L) pre-broadcast MLP bias row
        return mrows_ref[i]

    def relu(v):
        return jnp.maximum(v, 0.0)

    def affine(v, i):                # folded inference BatchNorm
        return v * row(_BN_S + i) + row(_BN_T + i)

    def lroll(v, s):                 # cyclic lane roll on the XLU
        return pltpu.roll(v, s % Wp, axis=1)

    def mix1x1(v, m):                # 1x1 conv via masked cyclic channel rolls
        b = _C11 + 5 * m
        return (v * row(b)
                + lroll(v, W) * row(b + 1) + lroll(v, -2 * W) * row(b + 2)
                + lroll(v, 2 * W) * row(b + 3) + lroll(v, -W) * row(b + 4))

    def vshift(v):                   # +/-1 shifts along H, zero padded
        z = jnp.zeros((1, Wp), f32)
        up = jnp.concatenate([z, v[:H - 1, :]], axis=0)   # row h -> v[h-1]
        dn = jnp.concatenate([v[1:, :], z], axis=0)       # row h -> v[h+1]
        return up, dn

    def dwconv(v, blk):              # depthwise 3x3, zero padding 1
        up, dn = vshift(v)
        acc = jnp.zeros((H, Wp), f32)
        for kh, vv in enumerate((up, v, dn)):
            b = _DW + 9 * blk + 3 * kh
            acc = (acc + lroll(vv, 1) * row(b) + vv * row(b + 1)
                   + lroll(vv, -1) * row(b + 2))
        return acc

    # ---- conv body: outer BN + 3 x ResConvBlock on the (H, Wp) slab --------
    x = affine(x_ref[0], 0)
    for blk in range(3):
        ident = x
        y = relu(affine(mix1x1(x, 2 * blk), 1 + 3 * blk))       # conv1->bn1->relu
        zz = relu(affine(dwconv(y, blk), 2 + 3 * blk))          # conv2->bn2->relu
        u = affine(mix1x1(zz, 2 * blk + 1), 3 + 3 * blk)        # conv3->bn3
        x = relu(u + ident)                                     # +identity->relu

    # ---- last_conv: ONE MXU pass, (M, 3Wp) x (H, 3Wp)^T -> (M, L=H) --------
    up, dn = vshift(x)
    xcat = jnp.concatenate([up, x, dn], axis=1)                 # (H, 3*Wp)
    nt = (((1,), (1,)), ((), ()))                               # contract lanes
    feat = lax.dot_general(wlt_ref[...], xcat, nt,
                           preferred_element_type=jnp.float32)  # (M, L)
    # last_conv bias is folded into the first neck bias (mrows[0])

    # ---- neck + fused head_p|head_c (batched over packed batches) ----------
    v = relu(jnp.dot(feat, mm_ref[0], preferred_element_type=jnp.float32)
             + mrow(0))
    for i in range(1, 4):
        v = relu(jnp.dot(v, mm_ref[i], preferred_element_type=jnp.float32)
                 + mrow(i))
    h = relu(jnp.dot(v, mm_ref[4], preferred_element_type=jnp.float32) + mrow(4))
    h = relu(jnp.dot(h, mm_ref[5], preferred_element_type=jnp.float32) + mrow(5))
    h = relu(jnp.dot(h, mm_ref[6], preferred_element_type=jnp.float32) + mrow(6))
    out = jax.nn.sigmoid(
        jnp.dot(h, mm_ref[7], preferred_element_type=jnp.float32) + mrow(7))
    o_ref[0, :, :] = out + mrow(8)   # prior folded into c_1 / c_2 slots


# ----------------------------------------------------------------------------
# Host-side parameter packing (done once, outside jit)
# ----------------------------------------------------------------------------
def _round_up(n, m):
    return -(-n // m) * m


def choose_bb(batch, width):
    """Batches packed per grid step: fill <=128 lanes, keep >=2 grid steps."""
    lane_cap = max(1, 128 // (3 * width))
    return int(max(1, min(lane_cap, -(-batch // 2))))


def pack_params(params, H, W, P, bb):
    L = H
    L4 = L // 4
    W3 = 3 * W
    Wp = bb * W3
    Wpad = _round_up(Wp, 128)
    M = 3 * bb
    assert 2 * L4 <= L and 3 * P <= L, "packed MLP assumes 2*(L//4) <= L and 3*P <= L"

    bn_s = np.asarray(params['bn_scale'], np.float32)   # (10, 3)
    bn_t = np.asarray(params['bn_shift'], np.float32)   # (10, 3)
    w1x1 = np.asarray(params['w1x1'], np.float32)       # (3, 2, 3, 3) [blk, which, out, in]
    wdw = np.asarray(params['wdw'], np.float32)         # (3, 3, 3, 3) [blk, c, kh, kw]
    wlast = np.asarray(params['wlast'], np.float32)     # (3, 3, W)    [c, kh, w]
    blast = np.asarray(params['blast'], np.float32)     # (3,)

    def chan(vals):                                     # (3,) per-channel -> (3W,)
        return np.repeat(np.asarray(vals, np.float32), W)

    rows = np.zeros((_NROWS, W3), np.float32)
    for i in range(10):
        rows[_BN_S + i] = chan(bn_s[i])
        rows[_BN_T + i] = chan(bn_t[i])
    # 1x1 convs: 5 rows each, the partners of {id, roll+W, roll-2W, roll+2W,
    # roll-W}; zeros wherever a roll would cross a channel/batch/pad boundary.
    for blk in range(3):
        for which in range(2):
            w = w1x1[blk, which]                        # (out, in)
            b = _C11 + 5 * (2 * blk + which)
            rows[b + 0] = chan([w[0, 0], w[1, 1], w[2, 2]])
            rows[b + 1] = chan([0.0,     w[1, 0], w[2, 1]])
            rows[b + 2] = chan([w[0, 2], 0.0,     0.0])
            rows[b + 3] = chan([0.0,     0.0,     w[2, 0]])
            rows[b + 4] = chan([w[0, 1], w[1, 2], 0.0])
    # depthwise 3x3: kw-edge taps zero-masked at w==0 / w==W-1 so the +/-1 lane
    # rolls never leak across channel / batch / padding boundaries.
    for blk in range(3):
        for kh in range(3):
            for kw in range(3):
                r = _DW + 9 * blk + 3 * kh + kw
                rows[r] = chan(wdw[blk, :, kh, kw])
                if kw == 0:
                    rows[r, 0::W] = 0.0
                if kw == 2:
                    rows[r, W - 1::W] = 0.0

    rows_p = np.zeros((_NROWS, Wpad), np.float32)
    rows_p[:, :Wp] = np.tile(rows, (1, bb))
    conv_rows = np.ascontiguousarray(                   # pre-broadcast along H
        np.broadcast_to(rows_p[:, None, :], (_NROWS, H, Wpad)))

    # grouped last_conv as one block-diagonal (M, 3*Wpad) weight matrix,
    # column layout matches xcat = [up | x | dn].
    wlt = np.zeros((M, 3 * Wpad), np.float32)
    for b in range(bb):
        for c in range(3):
            for kh in range(3):
                off = kh * Wpad + b * W3 + c * W
                wlt[3 * b + c, off:off + W] = wlast[c, kh, :]

    nW = np.asarray(params['nW'], np.float32)           # (4, L, L) [out, in]
    nb = np.asarray(params['nb'], np.float32)           # (4, L)
    pW = [np.asarray(params[k], np.float32) for k in ('pW1', 'pW2', 'pW3', 'pW4')]
    pb = [np.asarray(params[k], np.float32) for k in ('pb1', 'pb2', 'pb3', 'pb4')]
    cW = [np.asarray(params[k], np.float32) for k in ('cW1', 'cW2', 'cW3', 'cW4')]
    cb = [np.asarray(params[k], np.float32) for k in ('cb1', 'cb2', 'cb3', 'cb4')]
    prior = np.asarray(params['prior'], np.float32)

    mm = np.zeros((8, L, L), np.float32)
    for i in range(4):
        mm[i] = nW[i].T                                 # (in, out)
    mm[4, :, :L4] = pW[0].T
    mm[4, :, L4:2 * L4] = cW[0].T
    mm[5, :L4, :L4] = pW[1].T
    mm[5, L4:2 * L4, L4:2 * L4] = cW[1].T
    mm[6, :L4, :L4] = pW[2].T
    mm[6, L4:2 * L4, L4:2 * L4] = cW[2].T
    mm[7, :L4, :P] = pW[3].T
    mm[7, L4:2 * L4, P:3 * P] = cW[3].T

    mrows = np.zeros((9, M, L), np.float32)
    # first neck bias with the last_conv bias folded in (per (batch, ch) row)
    bias0 = nb[0][None, :] + blast[:, None] * nW[0].sum(axis=1)[None, :]
    mrows[0] = np.tile(bias0, (bb, 1))
    mrows[1, :, :] = nb[1]
    mrows[2, :, :] = nb[2]
    mrows[3, :, :] = nb[3]
    mrows[4, :, :2 * L4] = np.concatenate([pb[0], cb[0]])
    mrows[5, :, :2 * L4] = np.concatenate([pb[1], cb[1]])
    mrows[6, :, :2 * L4] = np.concatenate([pb[2], cb[2]])
    mrows[7, :, :3 * P] = np.concatenate([pb[3], cb[3]])
    mrows[8, :, P:2 * P] = prior
    mrows[8, :, 2 * P:3 * P] = prior

    return {'conv_rows': jnp.asarray(conv_rows),
            'last_w': jnp.asarray(wlt),
            'mlp_mats': jnp.asarray(mm),
            'mlp_rows': jnp.asarray(mrows)}


# ----------------------------------------------------------------------------
# Wrapper (single pallas_call, grid over batch groups)
# ----------------------------------------------------------------------------
def freq_conv_proposal_single_side(x, packed, num_proposal):
    B, C, H, W = x.shape
    assert C == 3
    P = num_proposal
    Wpad = packed['conv_rows'].shape[-1]
    L = packed['mlp_mats'].shape[-1]
    bb = packed['last_w'].shape[0] // 3
    Wp = bb * C * W
    G = -(-B // bb)
    Bp = G * bb

    if Bp != B:                      # pad batch to a multiple of bb
        x = jnp.concatenate([x, jnp.zeros((Bp - B, C, H, W), x.dtype)], axis=0)
    # (Bp,3,H,W) -> (G, H, bb*3*W): lane layout [b0c0 | b0c1 | b0c2 | b1c0 ...]
    xs = jnp.transpose(x.reshape(G, bb, C, H, W), (0, 3, 1, 2, 4)).reshape(G, H, Wp)
    if Wpad != Wp:                   # zero-pad lanes to a multiple of 128
        xs = jnp.pad(xs, ((0, 0), (0, 0), (0, Wpad - Wp)))

    kernel = functools.partial(_fused_kernel, width=W)
    out = pl.pallas_call(
        kernel,
        out_shape=jax.ShapeDtypeStruct((G, 3 * bb, L), jnp.float32),
        grid=(G,),
        in_specs=[
            pl.BlockSpec((1, H, Wpad), lambda g: (g, 0, 0)),
            pl.BlockSpec(packed['conv_rows'].shape, lambda g: (0, 0, 0)),
            pl.BlockSpec(packed['last_w'].shape, lambda g: (0, 0)),
            pl.BlockSpec(packed['mlp_mats'].shape, lambda g: (0, 0, 0)),
            pl.BlockSpec(packed['mlp_rows'].shape, lambda g: (0, 0, 0)),
        ],
        out_specs=pl.BlockSpec((1, 3 * bb, L), lambda g: (g, 0, 0)),
        compiler_params=pltpu.CompilerParams(
            dimension_semantics=("parallel",)),
    )(xs, packed['conv_rows'], packed['last_w'],
      packed['mlp_mats'], packed['mlp_rows'])

    out = out.reshape(Bp, 3, L)[:B]
    sub = {'p': out[:, :, :P],
           'c_1': out[:, :, P:2 * P],
           'c_2': out[:, :, 2 * P:3 * P]}
    return {'x_proposal': sub, 'y_proposal': sub}


# ----------------------------------------------------------------------------
# Deterministic parameter init (shapes follow the PyTorch module __init__)
# ----------------------------------------------------------------------------
def init_params(key, H, W, L, P):
    L4 = L // 4
    ks = jax.random.split(key, 32)
    n = lambda k, s, sc=0.2: sc * jax.random.normal(k, s, dtype=jnp.float32)

    # 10 BatchNorms: [0] outer norm, then per ResConvBlock (bn1, bn2, bn3)
    gamma = 1.0 + n(ks[0], (10, 3), 0.1)
    beta = n(ks[1], (10, 3), 0.1)
    mean = n(ks[2], (10, 3), 0.1)
    var = 0.5 + jnp.abs(n(ks[3], (10, 3), 0.2))
    eps = 1e-5
    bn_scale = gamma / jnp.sqrt(var + eps)
    bn_shift = beta - mean * bn_scale

    params = dict(
        bn_scale=bn_scale, bn_shift=bn_shift,
        w1x1=n(ks[4], (3, 2, 3, 3), 0.3),    # [blk, {conv1,conv3}, out, in]
        wdw=n(ks[5], (3, 3, 3, 3), 0.3),     # [blk, channel, kh, kw]
        wlast=n(ks[6], (3, 3, W), 0.2),      # [channel, kh, w]
        blast=n(ks[7], (3,), 0.1),
        nW=n(ks[8], (4, L, L), 0.15), nb=n(ks[9], (4, L), 0.1),
        pW1=n(ks[10], (L4, L), 0.2), pb1=n(ks[11], (L4,), 0.1),
        pW2=n(ks[12], (L4, L4), 0.3), pb2=n(ks[13], (L4,), 0.1),
        pW3=n(ks[14], (L4, L4), 0.3), pb3=n(ks[15], (L4,), 0.1),
        pW4=n(ks[16], (P, L4), 0.3), pb4=n(ks[17], (P,), 0.1),
        cW1=n(ks[18], (L4, L), 0.2), cb1=n(ks[19], (L4,), 0.1),
        cW2=n(ks[20], (L4, L4), 0.3), cb2=n(ks[21], (L4,), 0.1),
        cW3=n(ks[22], (L4, L4), 0.3), cb3=n(ks[23], (L4,), 0.1),
        cW4=n(ks[24], (2 * P, L4), 0.3), cb4=n(ks[25], (2 * P,), 0.1),
        prior=jnp.linspace(0.0, 0.9, P).astype(jnp.float32),
    )
    return params


# ----------------------------------------------------------------------------
# Pure-JAX reference (for correctness check)
# ----------------------------------------------------------------------------
def reference_forward(x, params):
    bs, bt = params['bn_scale'], params['bn_shift']
    hp = lax.Precision.HIGHEST

    def aff(v, idx):
        return v * bs[idx][None, :, None, None] + bt[idx][None, :, None, None]

    h = aff(x, 0)
    for blk in range(3):
        idn = h
        y = jnp.einsum('oi,bihw->bohw', params['w1x1'][blk, 0], h, precision=hp)
        y = jax.nn.relu(aff(y, 1 + blk * 3 + 0))
        z = lax.conv_general_dilated(
            y, params['wdw'][blk][:, None, :, :], (1, 1), ((1, 1), (1, 1)),
            dimension_numbers=('NCHW', 'OIHW', 'NCHW'),
            feature_group_count=3, precision=hp)
        z = jax.nn.relu(aff(z, 1 + blk * 3 + 1))
        u = jnp.einsum('oi,bihw->bohw', params['w1x1'][blk, 1], z, precision=hp)
        h = jax.nn.relu(aff(u, 1 + blk * 3 + 2) + idn)

    last = lax.conv_general_dilated(
        h, params['wlast'][:, None, :, :], (1, 1), ((1, 1), (0, 0)),
        dimension_numbers=('NCHW', 'OIHW', 'NCHW'),
        feature_group_count=3, precision=hp)
    last = last + params['blast'][None, :, None, None]
    v = last[..., 0]                                  # (B, 3, L)

    for i in range(4):
        v = jax.nn.relu(jnp.einsum('bcl,kl->bck', v, params['nW'][i],
                                   precision=hp) + params['nb'][i])

    def head(v, W1, b1, W2, b2, W3, b3, W4, b4):
        hh = jax.nn.relu(jnp.einsum('bcl,kl->bck', v, W1, precision=hp) + b1)
        hh = jax.nn.relu(jnp.einsum('bcl,kl->bck', hh, W2, precision=hp) + b2)
        hh = jax.nn.relu(jnp.einsum('bcl,kl->bck', hh, W3, precision=hp) + b3)
        return jax.nn.sigmoid(jnp.einsum('bcl,kl->bck', hh, W4, precision=hp) + b4)

    p = head(v, params['pW1'], params['pb1'], params['pW2'], params['pb2'],
             params['pW3'], params['pb3'], params['pW4'], params['pb4'])
    c = head(v, params['cW1'], params['cb1'], params['cW2'], params['cb2'],
             params['cW3'], params['cb3'], params['cW4'], params['cb4'])
    P = params['prior'].shape[0]
    prior = params['prior'][None, None, :]
    return p, c[..., :P] + prior, c[..., P:] + prior


if __name__ == "__main__":
    # img_size = (H=16, W=8), proposal_dim = -2  =>  length L = 16, width = 8
    B, C, H, W = 9, 3, 16, 8
    P = 4                                            # num_proposal

    key = jax.random.PRNGKey(0)
    pkey, xkey = jax.random.split(key)
    params = init_params(pkey, H, W, H, P)
    x = jax.random.normal(xkey, (B, C, H, W), dtype=jnp.float32)

    bb = choose_bb(B, W)          # 5 batches/step -> 120 live lanes, 2 grid steps
    packed = pack_params(params, H, W, P, bb)

    fwd = jax.jit(freq_conv_proposal_single_side, static_argnums=(2,))
    out = jax.block_until_ready(fwd(x, packed, P))

    p_ref, c1_ref, c2_ref = reference_forward(x, params)
    sp = out['x_proposal']
    for got, ref in ((sp['p'], p_ref), (sp['c_1'], c1_ref), (sp['c_2'], c2_ref)):
        np.testing.assert_allclose(np.asarray(got), np.asarray(ref),
                                   rtol=1e-4, atol=1e-4)
    print("KERNEL_OK")
</pallas_src>

<mosaic_0001>
module attributes {stable_mosaic.version = 11 : i64} {
  func.func @_fused_kernel(%arg0: i32, %arg1: memref<1x16x128xf32, #tpu.memory_space<vmem>>, %arg2: memref<77x16x128xf32, #tpu.memory_space<vmem>>, %arg3: memref<15x384xf32, #tpu.memory_space<vmem>>, %arg4: memref<8x16x16xf32, #tpu.memory_space<vmem>>, %arg5: memref<9x15x16xf32, #tpu.memory_space<vmem>>, %arg6: memref<1x15x16xf32, #tpu.memory_space<vmem>>) attributes {dimension_semantics = [#tpu.dimension_semantics<parallel>], iteration_bounds = array<i64: 2>, scalar_prefetch = 0 : i64, scratch_operands = 0 : i64, tpu.core_type = #tpu.core_type<tc>, window_params = [{transform_indices = @transform_0, window_bounds = array<i64: 1, 16, 128>}, {pipeline_mode = #tpu.pipeline_mode<synchronous>, transform_indices = @transform_1, window_bounds = array<i64: 77, 16, 128>}, {pipeline_mode = #tpu.pipeline_mode<synchronous>, transform_indices = @transform_2, window_bounds = array<i64: 15, 384>}, {pipeline_mode = #tpu.pipeline_mode<synchronous>, transform_indices = @transform_3, window_bounds = array<i64: 8, 16, 16>}, {pipeline_mode = #tpu.pipeline_mode<synchronous>, transform_indices = @transform_4, window_bounds = array<i64: 9, 15, 16>}, {transform_indices = @transform_5, window_bounds = array<i64: 1, 15, 16>}]} {
    %c0 = arith.constant 0 : index
    %c0_0 = arith.constant 0 : index
    %c0_1 = arith.constant 0 : index
    %0 = vector.load %arg1[%c0, %c0_0, %c0_1] : memref<1x16x128xf32, #tpu.memory_space<vmem>>, vector<1x16x128xf32>
    %1 = vector.shape_cast %0 : vector<1x16x128xf32> to vector<16x128xf32>
    %c0_2 = arith.constant 0 : index
    %c0_3 = arith.constant 0 : index
    %c0_4 = arith.constant 0 : index
    %2 = vector.load %arg2[%c0_2, %c0_3, %c0_4] : memref<77x16x128xf32, #tpu.memory_space<vmem>>, vector<1x16x128xf32>
    %3 = vector.shape_cast %2 : vector<1x16x128xf32> to vector<16x128xf32>
    %4 = arith.mulf %1, %3 : vector<16x128xf32>
    %c10 = arith.constant 10 : index
    %c0_5 = arith.constant 0 : index
    %c0_6 = arith.constant 0 : index
    %5 = vector.load %arg2[%c10, %c0_5, %c0_6] : memref<77x16x128xf32, #tpu.memory_space<vmem>>, vector<1x16x128xf32>
    %6 = vector.shape_cast %5 : vector<1x16x128xf32> to vector<16x128xf32>
    %7 = arith.addf %4, %6 : vector<16x128xf32>
    %c20 = arith.constant 20 : index
    %c0_7 = arith.constant 0 : index
    %c0_8 = arith.constant 0 : index
    %8 = vector.load %arg2[%c20, %c0_7, %c0_8] : memref<77x16x128xf32, #tpu.memory_space<vmem>>, vector<1x16x128xf32>
    %9 = vector.shape_cast %8 : vector<1x16x128xf32> to vector<16x128xf32>
    %10 = arith.mulf %7, %9 : vector<16x128xf32>
    %c8_i32 = arith.constant 8 : i32
    %11 = tpu.dynamic_rotate %7 by %c8_i32 dim 1 : vector<16x128xf32>, i32 -> vector<16x128xf32>
    %c21 = arith.constant 21 : index
    %c0_9 = arith.constant 0 : index
    %c0_10 = arith.constant 0 : index
    %12 = vector.load %arg2[%c21, %c0_9, %c0_10] : memref<77x16x128xf32, #tpu.memory_space<vmem>>, vector<1x16x128xf32>
    %13 = vector.shape_cast %12 : vector<1x16x128xf32> to vector<16x128xf32>
    %14 = arith.mulf %11, %13 : vector<16x128xf32>
    %15 = arith.addf %10, %14 : vector<16x128xf32>
    %c112_i32 = arith.constant 112 : i32
    %16 = tpu.dynamic_rotate %7 by %c112_i32 dim 1 : vector<16x128xf32>, i32 -> vector<16x128xf32>
    %c22 = arith.constant 22 : index
    %c0_11 = arith.constant 0 : index
    %c0_12 = arith.constant 0 : index
    %17 = vector.load %arg2[%c22, %c0_11, %c0_12] : memref<77x16x128xf32, #tpu.memory_space<vmem>>, vector<1x16x128xf32>
    %18 = vector.shape_cast %17 : vector<1x16x128xf32> to vector<16x128xf32>
    %19 = arith.mulf %16, %18 : vector<16x128xf32>
    %20 = arith.addf %15, %19 : vector<16x128xf32>
    %c16_i32 = arith.constant 16 : i32
    %21 = tpu.dynamic_rotate %7 by %c16_i32 dim 1 : vector<16x128xf32>, i32 -> vector<16x128xf32>
    %c23 = arith.constant 23 : index
    %c0_13 = arith.constant 0 : index
    %c0_14 = arith.constant 0 : index
    %22 = vector.load %arg2[%c23, %c0_13, %c0_14] : memref<77x16x128xf32, #tpu.memory_space<vmem>>, vector<1x16x128xf32>
    %23 = vector.shape_cast %22 : vector<1x16x128xf32> to vector<16x128xf32>
    %24 = arith.mulf %21, %23 : vector<16x128xf32>
    %25 = arith.addf %20, %24 : vector<16x128xf32>
    %c120_i32 = arith.constant 120 : i32
    %26 = tpu.dynamic_rotate %7 by %c120_i32 dim 1 : vector<16x128xf32>, i32 -> vector<16x128xf32>
    %c24 = arith.constant 24 : index
    %c0_15 = arith.constant 0 : index
    %c0_16 = arith.constant 0 : index
    %27 = vector.load %arg2[%c24, %c0_15, %c0_16] : memref<77x16x128xf32, #tpu.memory_space<vmem>>, vector<1x16x128xf32>
    %28 = vector.shape_cast %27 : vector<1x16x128xf32> to vector<16x128xf32>
    %29 = arith.mulf %26, %28 : vector<16x128xf32>
    %30 = arith.addf %25, %29 : vector<16x128xf32>
    %c1 = arith.constant 1 : index
    %c0_17 = arith.constant 0 : index
    %c0_18 = arith.constant 0 : index
    %31 = vector.load %arg2[%c1, %c0_17, %c0_18] : memref<77x16x128xf32, #tpu.memory_space<vmem>>, vector<1x16x128xf32>
    %32 = vector.shape_cast %31 : vector<1x16x128xf32> to vector<16x128xf32>
    %33 = arith.mulf %30, %32 : vector<16x128xf32>
    %c11 = arith.constant 11 : index
    %c0_19 = arith.constant 0 : index
    %c0_20 = arith.constant 0 : index
    %34 = vector.load %arg2[%c11, %c0_19, %c0_20] : memref<77x16x128xf32, #tpu.memory_space<vmem>>, vector<1x16x128xf32>
    %35 = vector.shape_cast %34 : vector<1x16x128xf32> to vector<16x128xf32>
    %36 = arith.addf %33, %35 : vector<16x128xf32>
    %cst = arith.constant 0.000000e+00 : f32
    %37 = vector.broadcast %cst : f32 to vector<16x128xf32>
    %38 = arith.maximumf %36, %37 : vector<16x128xf32>
    %cst_21 = arith.constant 0.000000e+00 : f32
    %39 = vector.broadcast %cst_21 : f32 to vector<1x128xf32>
    %40 = vector.extract_strided_slice %38 {offsets = [0, 0], sizes = [15, 128], strides = [1, 1]} : vector<16x128xf32> to vector<15x128xf32>
    %41 = tpu.concatenate %39, %40 in 0 : vector<1x128xf32>, vector<15x128xf32> -> vector<16x128xf32>
    %42 = vector.extract_strided_slice %38 {offsets = [1, 0], sizes = [15, 128], strides = [1, 1]} : vector<16x128xf32> to vector<15x128xf32>
    %43 = tpu.concatenate %42, %39 in 0 : vector<15x128xf32>, vector<1x128xf32> -> vector<16x128xf32>
    %cst_22 = arith.constant 0.000000e+00 : f32
    %44 = vector.broadcast %cst_22 : f32 to vector<16x128xf32>
    %c1_i32 = arith.constant 1 : i32
    %45 = tpu.dynamic_rotate %41 by %c1_i32 dim 1 : vector<16x128xf32>, i32 -> vector<16x128xf32>
    %c50 = arith.constant 50 : index
    %c0_23 = arith.constant 0 : index
    %c0_24 = arith.constant 0 : index
    %46 = vector.load %arg2[%c50, %c0_23, %c0_24] : memref<77x16x128xf32, #tpu.memory_space<vmem>>, vector<1x16x128xf32>
    %47 = vector.shape_cast %46 : vector<1x16x128xf32> to vector<16x128xf32>
    %48 = arith.mulf %45, %47 : vector<16x128xf32>
    %49 = arith.addf %44, %48 : vector<16x128xf32>
    %c51 = arith.constant 51 : index
    %c0_25 = arith.constant 0 : index
    %c0_26 = arith.constant 0 : index
    %50 = vector.load %arg2[%c51, %c0_25, %c0_26] : memref<77x16x128xf32, #tpu.memory_space<vmem>>, vector<1x16x128xf32>
    %51 = vector.shape_cast %50 : vector<1x16x128xf32> to vector<16x128xf32>
    %52 = arith.mulf %41, %51 : vector<16x128xf32>
    %53 = arith.addf %49, %52 : vector<16x128xf32>
    %c127_i32 = arith.constant 127 : i32
    %54 = tpu.dynamic_rotate %41 by %c127_i32 dim 1 : vector<16x128xf32>, i32 -> vector<16x128xf32>
    %c52 = arith.constant 52 : index
    %c0_27 = arith.constant 0 : index
    %c0_28 = arith.constant 0 : index
    %55 = vector.load %arg2[%c52, %c0_27, %c0_28] : memref<77x16x128xf32, #tpu.memory_space<vmem>>, vector<1x16x128xf32>
    %56 = vector.shape_cast %55 : vector<1x16x128xf32> to vector<16x128xf32>
    %57 = arith.mulf %54, %56 : vector<16x128xf32>
    %58 = arith.addf %53, %57 : vector<16x128xf32>
    %c1_i32_29 = arith.constant 1 : i32
    %59 = tpu.dynamic_rotate %38 by %c1_i32_29 dim 1 : vector<16x128xf32>, i32 -> vector<16x128xf32>
    %c53 = arith.constant 53 : index
    %c0_30 = arith.constant 0 : index
    %c0_31 = arith.constant 0 : index
    %60 = vector.load %arg2[%c53, %c0_30, %c0_31] : memref<77x16x128xf32, #tpu.memory_space<vmem>>, vector<1x16x128xf32>
    %61 = vector.shape_cast %60 : vector<1x16x128xf32> to vector<16x128xf32>
    %62 = arith.mulf %59, %61 : vector<16x128xf32>
    %63 = arith.addf %58, %62 : vector<16x128xf32>
    %c54 = arith.constant 54 : index
    %c0_32 = arith.constant 0 : index
    %c0_33 = arith.constant 0 : index
    %64 = vector.load %arg2[%c54, %c0_32, %c0_33] : memref<77x16x128xf32, #tpu.memory_space<vmem>>, vector<1x16x128xf32>
    %65 = vector.shape_cast %64 : vector<1x16x128xf32> to vector<16x128xf32>
    %66 = arith.mulf %38, %65 : vector<16x128xf32>
    %67 = arith.addf %63, %66 : vector<16x128xf32>
    %c127_i32_34 = arith.constant 127 : i32
    %68 = tpu.dynamic_rotate %38 by %c127_i32_34 dim 1 : vector<16x128xf32>, i32 -> vector<16x128xf32>
    %c55 = arith.constant 55 : index
    %c0_35 = arith.constant 0 : index
    %c0_36 = arith.constant 0 : index
    %69 = vector.load %arg2[%c55, %c0_35, %c0_36] : memref<77x16x128xf32, #tpu.memory_space<vmem>>, vector<1x16x128xf32>
    %70 = vector.shape_cast %69 : vector<1x16x128xf32> to vector<16x128xf32>
    %71 = arith.mulf %68, %70 : vector<16x128xf32>
    %72 = arith.addf %67, %71 : vector<16x128xf32>
    %c1_i32_37 = arith.constant 1 : i32
    %73 = tpu.dynamic_rotate %43 by %c1_i32_37 dim 1 : vector<16x128xf32>, i32 -> vector<16x128xf32>
    %c56 = arith.constant 56 : index
    %c0_38 = arith.constant 0 : index
    %c0_39 = arith.constant 0 : index
    %74 = vector.load %arg2[%c56, %c0_38, %c0_39] : memref<77x16x128xf32, #tpu.memory_space<vmem>>, vector<1x16x128xf32>
    %75 = vector.shape_cast %74 : vector<1x16x128xf32> to vector<16x128xf32>
    %76 = arith.mulf %73, %75 : vector<16x128xf32>
    %77 = arith.addf %72, %76 : vector<16x128xf32>
    %c57 = arith.constant 57 : index
    %c0_40 = arith.constant 0 : index
    %c0_41 = arith.constant 0 : index
    %78 = vector.load %arg2[%c57, %c0_40, %c0_41] : memref<77x16x128xf32, #tpu.memory_space<vmem>>, vector<1x16x128xf32>
    %79 = vector.shape_cast %78 : vector<1x16x128xf32> to vector<16x128xf32>
    %80 = arith.mulf %43, %79 : vector<16x128xf32>
    %81 = arith.addf %77, %80 : vector<16x128xf32>
    %c127_i32_42 = arith.constant 127 : i32
    %82 = tpu.dynamic_rotate %43 by %c127_i32_42 dim 1 : vector<16x128xf32>, i32 -> vector<16x128xf32>
    %c58 = arith.constant 58 : index
    %c0_43 = arith.constant 0 : index
    %c0_44 = arith.constant 0 : index
    %83 = vector.load %arg2[%c58, %c0_43, %c0_44] : memref<77x16x128xf32, #tpu.memory_space<vmem>>, vector<1x16x128xf32>
    %84 = vector.shape_cast %83 : vector<1x16x128xf32> to vector<16x128xf32>
    %85 = arith.mulf %82, %84 : vector<16x128xf32>
    %86 = arith.addf %81, %85 : vector<16x128xf32>
    %c2 = arith.constant 2 : index
    %c0_45 = arith.constant 0 : index
    %c0_46 = arith.constant 0 : index
    %87 = vector.load %arg2[%c2, %c0_45, %c0_46] : memref<77x16x128xf32, #tpu.memory_space<vmem>>, vector<1x16x128xf32>
    %88 = vector.shape_cast %87 : vector<1x16x128xf32> to vector<16x128xf32>
    %89 = arith.mulf %86, %88 : vector<16x128xf32>
    %c12 = arith.constant 12 : index
    %c0_47 = arith.constant 0 : index
    %c0_48 = arith.constant 0 : index
    %90 = vector.load %arg2[%c12, %c0_47, %c0_48] : memref<77x16x128xf32, #tpu.memory_space<vmem>>, vector<1x16x128xf32>
    %91 = vector.shape_cast %90 : vector<1x16x128xf32> to vector<16x128xf32>
    %92 = arith.addf %89, %91 : vector<16x128xf32>
    %cst_49 = arith.constant 0.000000e+00 : f32
    %93 = vector.broadcast %cst_49 : f32 to vector<16x128xf32>
    %94 = arith.maximumf %92, %93 : vector<16x128xf32>
    %c25 = arith.constant 25 : index
    %c0_50 = arith.constant 0 : index
    %c0_51 = arith.constant 0 : index
    %95 = vector.load %arg2[%c25, %c0_50, %c0_51] : memref<77x16x128xf32, #tpu.memory_space<vmem>>, vector<1x16x128xf32>
    %96 = vector.shape_cast %95 : vector<1x16x128xf32> to vector<16x128xf32>
    %97 = arith.mulf %94, %96 : vector<16x128xf32>
    %c8_i32_52 = arith.constant 8 : i32
    %98 = tpu.dynamic_rotate %94 by %c8_i32_52 dim 1 : vector<16x128xf32>, i32 -> vector<16x128xf32>
    %c26 = arith.constant 26 : index
    %c0_53 = arith.constant 0 : index
    %c0_54 = arith.constant 0 : index
    %99 = vector.load %arg2[%c26, %c0_53, %c0_54] : memref<77x16x128xf32, #tpu.memory_space<vmem>>, vector<1x16x128xf32>
    %100 = vector.shape_cast %99 : vector<1x16x128xf32> to vector<16x128xf32>
    %101 = arith.mulf %98, %100 : vector<16x128xf32>
    %102 = arith.addf %97, %101 : vector<16x128xf32>
    %c112_i32_55 = arith.constant 112 : i32
    %103 = tpu.dynamic_rotate %94 by %c112_i32_55 dim 1 : vector<16x128xf32>, i32 -> vector<16x128xf32>
    %c27 = arith.constant 27 : index
    %c0_56 = arith.constant 0 : index
    %c0_57 = arith.constant 0 : index
    %104 = vector.load %arg2[%c27, %c0_56, %c0_57] : memref<77x16x128xf32, #tpu.memory_space<vmem>>, vector<1x16x128xf32>
    %105 = vector.shape_cast %104 : vector<1x16x128xf32> to vector<16x128xf32>
    %106 = arith.mulf %103, %105 : vector<16x128xf32>
    %107 = arith.addf %102, %106 : vector<16x128xf32>
    %c16_i32_58 = arith.constant 16 : i32
    %108 = tpu.dynamic_rotate %94 by %c16_i32_58 dim 1 : vector<16x128xf32>, i32 -> vector<16x128xf32>
    %c28 = arith.constant 28 : index
    %c0_59 = arith.constant 0 : index
    %c0_60 = arith.constant 0 : index
    %109 = vector.load %arg2[%c28, %c0_59, %c0_60] : memref<77x16x128xf32, #tpu.memory_space<vmem>>, vector<1x16x128xf32>
    %110 = vector.shape_cast %109 : vector<1x16x128xf32> to vector<16x128xf32>
    %111 = arith.mulf %108, %110 : vector<16x128xf32>
    %112 = arith.addf %107, %111 : vector<16x128xf32>
    %c120_i32_61 = arith.constant 120 : i32
    %113 = tpu.dynamic_rotate %94 by %c120_i32_61 dim 1 : vector<16x128xf32>, i32 -> vector<16x128xf32>
    %c29 = arith.constant 29 : index
    %c0_62 = arith.constant 0 : index
    %c0_63 = arith.constant 0 : index
    %114 = vector.load %arg2[%c29, %c0_62, %c0_63] : memref<77x16x128xf32, #tpu.memory_space<vmem>>, vector<1x16x128xf32>
    %115 = vector.shape_cast %114 : vector<1x16x128xf32> to vector<16x128xf32>
    %116 = arith.mulf %113, %115 : vector<16x128xf32>
    %117 = arith.addf %112, %116 : vector<16x128xf32>
    %c3 = arith.constant 3 : index
    %c0_64 = arith.constant 0 : index
    %c0_65 = arith.constant 0 : index
    %118 = vector.load %arg2[%c3, %c0_64, %c0_65] : memref<77x16x128xf32, #tpu.memory_space<vmem>>, vector<1x16x128xf32>
    %119 = vector.shape_cast %118 : vector<1x16x128xf32> to vector<16x128xf32>
    %120 = arith.mulf %117, %119 : vector<16x128xf32>
    %c13 = arith.constant 13 : index
    %c0_66 = arith.constant 0 : index
    %c0_67 = arith.constant 0 : index
    %121 = vector.load %arg2[%c13, %c0_66, %c0_67] : memref<77x16x128xf32, #tpu.memory_space<vmem>>, vector<1x16x128xf32>
    %122 = vector.shape_cast %121 : vector<1x16x128xf32> to vector<16x128xf32>
    %123 = arith.addf %120, %122 : vector<16x128xf32>
    %124 = arith.addf %123, %7 : vector<16x128xf32>
    %cst_68 = arith.constant 0.000000e+00 : f32
    %125 = vector.broadcast %cst_68 : f32 to vector<16x128xf32>
    %126 = arith.maximumf %124, %125 : vector<16x128xf32>
    %c30 = arith.constant 30 : index
    %c0_69 = arith.constant 0 : index
    %c0_70 = arith.constant 0 : index
    %127 = vector.load %arg2[%c30, %c0_69, %c0_70] : memref<77x16x128xf32, #tpu.memory_space<vmem>>, vector<1x16x128xf32>
    %128 = vector.shape_cast %127 : vector<1x16x128xf32> to vector<16x128xf32>
    %129 = arith.mulf %126, %128 : vector<16x128xf32>
    %c8_i32_71 = arith.constant 8 : i32
    %130 = tpu.dynamic_rotate %126 by %c8_i32_71 dim 1 : vector<16x128xf32>, i32 -> vector<16x128xf32>
    %c31 = arith.constant 31 : index
    %c0_72 = arith.constant 0 : index
    %c0_73 = arith.constant 0 : index
    %131 = vector.load %arg2[%c31, %c0_72, %c0_73] : memref<77x16x128xf32, #tpu.memory_space<vmem>>, vector<1x16x128xf32>
    %132 = vector.shape_cast %131 : vector<1x16x128xf32> to vector<16x128xf32>
    %133 = arith.mulf %130, %132 : vector<16x128xf32>
    %134 = arith.addf %129, %133 : vector<16x128xf32>
    %c112_i32_74 = arith.constant 112 : i32
    %135 = tpu.dynamic_rotate %126 by %c112_i32_74 dim 1 : vector<16x128xf32>, i32 -> vector<16x128xf32>
    %c32 = arith.constant 32 : index
    %c0_75 = arith.constant 0 : index
    %c0_76 = arith.constant 0 : index
    %136 = vector.load %arg2[%c32, %c0_75, %c0_76] : memref<77x16x128xf32, #tpu.memory_space<vmem>>, vector<1x16x128xf32>
    %137 = vector.shape_cast %136 : vector<1x16x128xf32> to vector<16x128xf32>
    %138 = arith.mulf %135, %137 : vector<16x128xf32>
    %139 = arith.addf %134, %138 : vector<16x128xf32>
    %c16_i32_77 = arith.constant 16 : i32
    %140 = tpu.dynamic_rotate %126 by %c16_i32_77 dim 1 : vector<16x128xf32>, i32 -> vector<16x128xf32>
    %c33 = arith.constant 33 : index
    %c0_78 = arith.constant 0 : index
    %c0_79 = arith.constant 0 : index
    %141 = vector.load %arg2[%c33, %c0_78, %c0_79] : memref<77x16x128xf32, #tpu.memory_space<vmem>>, vector<1x16x128xf32>
    %142 = vector.shape_cast %141 : vector<1x16x128xf32> to vector<16x128xf32>
    %143 = arith.mulf %140, %142 : vector<16x128xf32>
    %144 = arith.addf %139, %143 : vector<16x128xf32>
    %c120_i32_80 = arith.constant 120 : i32
    %145 = tpu.dynamic_rotate %126 by %c120_i32_80 dim 1 : vector<16x128xf32>, i32 -> vector<16x128xf32>
    %c34 = arith.constant 34 : index
    %c0_81 = arith.constant 0 : index
    %c0_82 = arith.constant 0 : index
    %146 = vector.load %arg2[%c34, %c0_81, %c0_82] : memref<77x16x128xf32, #tpu.memory_space<vmem>>, vector<1x16x128xf32>
    %147 = vector.shape_cast %146 : vector<1x16x128xf32> to vector<16x128xf32>
    %148 = arith.mulf %145, %147 : vector<16x128xf32>
    %149 = arith.addf %144, %148 : vector<16x128xf32>
    %c4 = arith.constant 4 : index
    %c0_83 = arith.constant 0 : index
    %c0_84 = arith.constant 0 : index
    %150 = vector.load %arg2[%c4, %c0_83, %c0_84] : memref<77x16x128xf32, #tpu.memory_space<vmem>>, vector<1x16x128xf32>
    %151 = vector.shape_cast %150 : vector<1x16x128xf32> to vector<16x128xf32>
    %152 = arith.mulf %149, %151 : vector<16x128xf32>
    %c14 = arith.constant 14 : index
    %c0_85 = arith.constant 0 : index
    %c0_86 = arith.constant 0 : index
    %153 = vector.load %arg2[%c14, %c0_85, %c0_86] : memref<77x16x128xf32, #tpu.memory_space<vmem>>, vector<1x16x128xf32>
    %154 = vector.shape_cast %153 : vector<1x16x128xf32> to vector<16x128xf32>
    %155 = arith.addf %152, %154 : vector<16x128xf32>
    %cst_87 = arith.constant 0.000000e+00 : f32
    %156 = vector.broadcast %cst_87 : f32 to vector<16x128xf32>
    %157 = arith.maximumf %155, %156 : vector<16x128xf32>
    %cst_88 = arith.constant 0.000000e+00 : f32
    %158 = vector.broadcast %cst_88 : f32 to vector<1x128xf32>
    %159 = vector.extract_strided_slice %157 {offsets = [0, 0], sizes = [15, 128], strides = [1, 1]} : vector<16x128xf32> to vector<15x128xf32>
    %160 = tpu.concatenate %158, %159 in 0 : vector<1x128xf32>, vector<15x128xf32> -> vector<16x128xf32>
    %161 = vector.extract_strided_slice %157 {offsets = [1, 0], sizes = [15, 128], strides = [1, 1]} : vector<16x128xf32> to vector<15x128xf32>
    %162 = tpu.concatenate %161, %158 in 0 : vector<15x128xf32>, vector<1x128xf32> -> vector<16x128xf32>
    %cst_89 = arith.constant 0.000000e+00 : f32
    %163 = vector.broadcast %cst_89 : f32 to vector<16x128xf32>
    %c1_i32_90 = arith.constant 1 : i32
    %164 = tpu.dynamic_rotate %160 by %c1_i32_90 dim 1 : vector<16x128xf32>, i32 -> vector<16x128xf32>
    %c59 = arith.constant 59 : index
    %c0_91 = arith.constant 0 : index
    %c0_92 = arith.constant 0 : index
    %165 = vector.load %arg2[%c59, %c0_91, %c0_92] : memref<77x16x128xf32, #tpu.memory_space<vmem>>, vector<1x16x128xf32>
    %166 = vector.shape_cast %165 : vector<1x16x128xf32> to vector<16x128xf32>
    %167 = arith.mulf %164, %166 : vector<16x128xf32>
    %168 = arith.addf %163, %167 : vector<16x128xf32>
    %c60 = arith.constant 60 : index
    %c0_93 = arith.constant 0 : index
    %c0_94 = arith.constant 0 : index
    %169 = vector.load %arg2[%c60, %c0_93, %c0_94] : memref<77x16x128xf32, #tpu.memory_space<vmem>>, vector<1x16x128xf32>
    %170 = vector.shape_cast %169 : vector<1x16x128xf32> to vector<16x128xf32>
    %171 = arith.mulf %160, %170 : vector<16x128xf32>
    %172 = arith.addf %168, %171 : vector<16x128xf32>
    %c127_i32_95 = arith.constant 127 : i32
    %173 = tpu.dynamic_rotate %160 by %c127_i32_95 dim 1 : vector<16x128xf32>, i32 -> vector<16x128xf32>
    %c61 = arith.constant 61 : index
    %c0_96 = arith.constant 0 : index
    %c0_97 = arith.constant 0 : index
    %174 = vector.load %arg2[%c61, %c0_96, %c0_97] : memref<77x16x128xf32, #tpu.memory_space<vmem>>, vector<1x16x128xf32>
    %175 = vector.shape_cast %174 : vector<1x16x128xf32> to vector<16x128xf32>
    %176 = arith.mulf %173, %175 : vector<16x128xf32>
    %177 = arith.addf %172, %176 : vector<16x128xf32>
    %c1_i32_98 = arith.constant 1 : i32
    %178 = tpu.dynamic_rotate %157 by %c1_i32_98 dim 1 : vector<16x128xf32>, i32 -> vector<16x128xf32>
    %c62 = arith.constant 62 : index
    %c0_99 = arith.constant 0 : index
    %c0_100 = arith.constant 0 : index
    %179 = vector.load %arg2[%c62, %c0_99, %c0_100] : memref<77x16x128xf32, #tpu.memory_space<vmem>>, vector<1x16x128xf32>
    %180 = vector.shape_cast %179 : vector<1x16x128xf32> to vector<16x128xf32>
    %181 = arith.mulf %178, %180 : vector<16x128xf32>
    %182 = arith.addf %177, %181 : vector<16x128xf32>
    %c63 = arith.constant 63 : index
    %c0_101 = arith.constant 0 : index
    %c0_102 = arith.constant 0 : index
    %183 = vector.load %arg2[%c63, %c0_101, %c0_102] : memref<77x16x128xf32, #tpu.memory_space<vmem>>, vector<1x16x128xf32>
    %184 = vector.shape_cast %183 : vector<1x16x128xf32> to vector<16x128xf32>
    %185 = arith.mulf %157, %184 : vector<16x128xf32>
    %186 = arith.addf %182, %185 : vector<16x128xf32>
    %c127_i32_103 = arith.constant 127 : i32
    %187 = tpu.dynamic_rotate %157 by %c127_i32_103 dim 1 : vector<16x128xf32>, i32 -> vector<16x128xf32>
    %c64 = arith.constant 64 : index
    %c0_104 = arith.constant 0 : index
    %c0_105 = arith.constant 0 : index
    %188 = vector.load %arg2[%c64, %c0_104, %c0_105] : memref<77x16x128xf32, #tpu.memory_space<vmem>>, vector<1x16x128xf32>
    %189 = vector.shape_cast %188 : vector<1x16x128xf32> to vector<16x128xf32>
    %190 = arith.mulf %187, %189 : vector<16x128xf32>
    %191 = arith.addf %186, %190 : vector<16x128xf32>
    %c1_i32_106 = arith.constant 1 : i32
    %192 = tpu.dynamic_rotate %162 by %c1_i32_106 dim 1 : vector<16x128xf32>, i32 -> vector<16x128xf32>
    %c65 = arith.constant 65 : index
    %c0_107 = arith.constant 0 : index
    %c0_108 = arith.constant 0 : index
    %193 = vector.load %arg2[%c65, %c0_107, %c0_108] : memref<77x16x128xf32, #tpu.memory_space<vmem>>, vector<1x16x128xf32>
    %194 = vector.shape_cast %193 : vector<1x16x128xf32> to vector<16x128xf32>
    %195 = arith.mulf %192, %194 : vector<16x128xf32>
    %196 = arith.addf %191, %195 : vector<16x128xf32>
    %c66 = arith.constant 66 : index
    %c0_109 = arith.constant 0 : index
    %c0_110 = arith.constant 0 : index
    %197 = vector.load %arg2[%c66, %c0_109, %c0_110] : memref<77x16x128xf32, #tpu.memory_space<vmem>>, vector<1x16x128xf32>
    %198 = vector.shape_cast %197 : vector<1x16x128xf32> to vector<16x128xf32>
    %199 = arith.mulf %162, %198 : vector<16x128xf32>
    %200 = arith.addf %196, %199 : vector<16x128xf32>
    %c127_i32_111 = arith.constant 127 : i32
    %201 = tpu.dynamic_rotate %162 by %c127_i32_111 dim 1 : vector<16x128xf32>, i32 -> vector<16x128xf32>
    %c67 = arith.constant 67 : index
    %c0_112 = arith.constant 0 : index
    %c0_113 = arith.constant 0 : index
    %202 = vector.load %arg2[%c67, %c0_112, %c0_113] : memref<77x16x128xf32, #tpu.memory_space<vmem>>, vector<1x16x128xf32>
    %203 = vector.shape_cast %202 : vector<1x16x128xf32> to vector<16x128xf32>
    %204 = arith.mulf %201, %203 : vector<16x128xf32>
    %205 = arith.addf %200, %204 : vector<16x128xf32>
    %c5 = arith.constant 5 : index
    %c0_114 = arith.constant 0 : index
    %c0_115 = arith.constant 0 : index
    %206 = vector.load %arg2[%c5, %c0_114, %c0_115] : memref<77x16x128xf32, #tpu.memory_space<vmem>>, vector<1x16x128xf32>
    %207 = vector.shape_cast %206 : vector<1x16x128xf32> to vector<16x128xf32>
    %208 = arith.mulf %205, %207 : vector<16x128xf32>
    %c15 = arith.constant 15 : index
    %c0_116 = arith.constant 0 : index
    %c0_117 = arith.constant 0 : index
    %209 = vector.load %arg2[%c15, %c0_116, %c0_117] : memref<77x16x128xf32, #tpu.memory_space<vmem>>, vector<1x16x128xf32>
    %210 = vector.shape_cast %209 : vector<1x16x128xf32> to vector<16x128xf32>
    %211 = arith.addf %208, %210 : vector<16x128xf32>
    %cst_118 = arith.constant 0.000000e+00 : f32
    %212 = vector.broadcast %cst_118 : f32 to vector<16x128xf32>
    %213 = arith.maximumf %211, %212 : vector<16x128xf32>
    %c35 = arith.constant 35 : index
    %c0_119 = arith.constant 0 : index
    %c0_120 = arith.constant 0 : index
    %214 = vector.load %arg2[%c35, %c0_119, %c0_120] : memref<77x16x128xf32, #tpu.memory_space<vmem>>, vector<1x16x128xf32>
    %215 = vector.shape_cast %214 : vector<1x16x128xf32> to vector<16x128xf32>
    %216 = arith.mulf %213, %215 : vector<16x128xf32>
    %c8_i32_121 = arith.constant 8 : i32
    %217 = tpu.dynamic_rotate %213 by %c8_i32_121 dim 1 : vector<16x128xf32>, i32 -> vector<16x128xf32>
    %c36 = arith.constant 36 : index
    %c0_122 = arith.constant 0 : index
    %c0_123 = arith.constant 0 : index
    %218 = vector.load %arg2[%c36, %c0_122, %c0_123] : memref<77x16x128xf32, #tpu.memory_space<vmem>>, vector<1x16x128xf32>
    %219 = vector.shape_cast %218 : vector<1x16x128xf32> to vector<16x128xf32>
    %220 = arith.mulf %217, %219 : vector<16x128xf32>
    %221 = arith.addf %216, %220 : vector<16x128xf32>
    %c112_i32_124 = arith.constant 112 : i32
    %222 = tpu.dynamic_rotate %213 by %c112_i32_124 dim 1 : vector<16x128xf32>, i32 -> vector<16x128xf32>
    %c37 = arith.constant 37 : index
    %c0_125 = arith.constant 0 : index
    %c0_126 = arith.constant 0 : index
    %223 = vector.load %arg2[%c37, %c0_125, %c0_126] : memref<77x16x128xf32, #tpu.memory_space<vmem>>, vector<1x16x128xf32>
    %224 = vector.shape_cast %223 : vector<1x16x128xf32> to vector<16x128xf32>
    %225 = arith.mulf %222, %224 : vector<16x128xf32>
    %226 = arith.addf %221, %225 : vector<16x128xf32>
    %c16_i32_127 = arith.constant 16 : i32
    %227 = tpu.dynamic_rotate %213 by %c16_i32_127 dim 1 : vector<16x128xf32>, i32 -> vector<16x128xf32>
    %c38 = arith.constant 38 : index
    %c0_128 = arith.constant 0 : index
    %c0_129 = arith.constant 0 : index
    %228 = vector.load %arg2[%c38, %c0_128, %c0_129] : memref<77x16x128xf32, #tpu.memory_space<vmem>>, vector<1x16x128xf32>
    %229 = vector.shape_cast %228 : vector<1x16x128xf32> to vector<16x128xf32>
    %230 = arith.mulf %227, %229 : vector<16x128xf32>
    %231 = arith.addf %226, %230 : vector<16x128xf32>
    %c120_i32_130 = arith.constant 120 : i32
    %232 = tpu.dynamic_rotate %213 by %c120_i32_130 dim 1 : vector<16x128xf32>, i32 -> vector<16x128xf32>
    %c39 = arith.constant 39 : index
    %c0_131 = arith.constant 0 : index
    %c0_132 = arith.constant 0 : index
    %233 = vector.load %arg2[%c39, %c0_131, %c0_132] : memref<77x16x128xf32, #tpu.memory_space<vmem>>, vector<1x16x128xf32>
    %234 = vector.shape_cast %233 : vector<1x16x128xf32> to vector<16x128xf32>
    %235 = arith.mulf %232, %234 : vector<16x128xf32>
    %236 = arith.addf %231, %235 : vector<16x128xf32>
    %c6 = arith.constant 6 : index
    %c0_133 = arith.constant 0 : index
    %c0_134 = arith.constant 0 : index
    %237 = vector.load %arg2[%c6, %c0_133, %c0_134] : memref<77x16x128xf32, #tpu.memory_space<vmem>>, vector<1x16x128xf32>
    %238 = vector.shape_cast %237 : vector<1x16x128xf32> to vector<16x128xf32>
    %239 = arith.mulf %236, %238 : vector<16x128xf32>
    %c16 = arith.constant 16 : index
    %c0_135 = arith.constant 0 : index
    %c0_136 = arith.constant 0 : index
    %240 = vector.load %arg2[%c16, %c0_135, %c0_136] : memref<77x16x128xf32, #tpu.memory_space<vmem>>, vector<1x16x128xf32>
    %241 = vector.shape_cast %240 : vector<1x16x128xf32> to vector<16x128xf32>
    %242 = arith.addf %239, %241 : vector<16x128xf32>
    %243 = arith.addf %242, %126 : vector<16x128xf32>
    %cst_137 = arith.constant 0.000000e+00 : f32
    %244 = vector.broadcast %cst_137 : f32 to vector<16x128xf32>
    %245 = arith.maximumf %243, %244 : vector<16x128xf32>
    %c40 = arith.constant 40 : index
    %c0_138 = arith.constant 0 : index
    %c0_139 = arith.constant 0 : index
    %246 = vector.load %arg2[%c40, %c0_138, %c0_139] : memref<77x16x128xf32, #tpu.memory_space<vmem>>, vector<1x16x128xf32>
    %247 = vector.shape_cast %246 : vector<1x16x128xf32> to vector<16x128xf32>
    %248 = arith.mulf %245, %247 : vector<16x128xf32>
    %c8_i32_140 = arith.constant 8 : i32
    %249 = tpu.dynamic_rotate %245 by %c8_i32_140 dim 1 : vector<16x128xf32>, i32 -> vector<16x128xf32>
    %c41 = arith.constant 41 : index
    %c0_141 = arith.constant 0 : index
    %c0_142 = arith.constant 0 : index
    %250 = vector.load %arg2[%c41, %c0_141, %c0_142] : memref<77x16x128xf32, #tpu.memory_space<vmem>>, vector<1x16x128xf32>
    %251 = vector.shape_cast %250 : vector<1x16x128xf32> to vector<16x128xf32>
    %252 = arith.mulf %249, %251 : vector<16x128xf32>
    %253 = arith.addf %248, %252 : vector<16x128xf32>
    %c112_i32_143 = arith.constant 112 : i32
    %254 = tpu.dynamic_rotate %245 by %c112_i32_143 dim 1 : vector<16x128xf32>, i32 -> vector<16x128xf32>
    %c42 = arith.constant 42 : index
    %c0_144 = arith.constant 0 : index
    %c0_145 = arith.constant 0 : index
    %255 = vector.load %arg2[%c42, %c0_144, %c0_145] : memref<77x16x128xf32, #tpu.memory_space<vmem>>, vector<1x16x128xf32>
    %256 = vector.shape_cast %255 : vector<1x16x128xf32> to vector<16x128xf32>
    %257 = arith.mulf %254, %256 : vector<16x128xf32>
    %258 = arith.addf %253, %257 : vector<16x128xf32>
    %c16_i32_146 = arith.constant 16 : i32
    %259 = tpu.dynamic_rotate %245 by %c16_i32_146 dim 1 : vector<16x128xf32>, i32 -> vector<16x128xf32>
    %c43 = arith.constant 43 : index
    %c0_147 = arith.constant 0 : index
    %c0_148 = arith.constant 0 : index
    %260 = vector.load %arg2[%c43, %c0_147, %c0_148] : memref<77x16x128xf32, #tpu.memory_space<vmem>>, vector<1x16x128xf32>
    %261 = vector.shape_cast %260 : vector<1x16x128xf32> to vector<16x128xf32>
    %262 = arith.mulf %259, %261 : vector<16x128xf32>
    %263 = arith.addf %258, %262 : vector<16x128xf32>
    %c120_i32_149 = arith.constant 120 : i32
    %264 = tpu.dynamic_rotate %245 by %c120_i32_149 dim 1 : vector<16x128xf32>, i32 -> vector<16x128xf32>
    %c44 = arith.constant 44 : index
    %c0_150 = arith.constant 0 : index
    %c0_151 = arith.constant 0 : index
    %265 = vector.load %arg2[%c44, %c0_150, %c0_151] : memref<77x16x128xf32, #tpu.memory_space<vmem>>, vector<1x16x128xf32>
    %266 = vector.shape_cast %265 : vector<1x16x128xf32> to vector<16x128xf32>
    %267 = arith.mulf %264, %266 : vector<16x128xf32>
    %268 = arith.addf %263, %267 : vector<16x128xf32>
    %c7 = arith.constant 7 : index
    %c0_152 = arith.constant 0 : index
    %c0_153 = arith.constant 0 : index
    %269 = vector.load %arg2[%c7, %c0_152, %c0_153] : memref<77x16x128xf32, #tpu.memory_space<vmem>>, vector<1x16x128xf32>
    %270 = vector.shape_cast %269 : vector<1x16x128xf32> to vector<16x128xf32>
    %271 = arith.mulf %268, %270 : vector<16x128xf32>
    %c17 = arith.constant 17 : index
    %c0_154 = arith.constant 0 : index
    %c0_155 = arith.constant 0 : index
    %272 = vector.load %arg2[%c17, %c0_154, %c0_155] : memref<77x16x128xf32, #tpu.memory_space<vmem>>, vector<1x16x128xf32>
    %273 = vector.shape_cast %272 : vector<1x16x128xf32> to vector<16x128xf32>
    %274 = arith.addf %271, %273 : vector<16x128xf32>
    %cst_156 = arith.constant 0.000000e+00 : f32
    %275 = vector.broadcast %cst_156 : f32 to vector<16x128xf32>
    %276 = arith.maximumf %274, %275 : vector<16x128xf32>
    %cst_157 = arith.constant 0.000000e+00 : f32
    %277 = vector.broadcast %cst_157 : f32 to vector<1x128xf32>
    %278 = vector.extract_strided_slice %276 {offsets = [0, 0], sizes = [15, 128], strides = [1, 1]} : vector<16x128xf32> to vector<15x128xf32>
    %279 = tpu.concatenate %277, %278 in 0 : vector<1x128xf32>, vector<15x128xf32> -> vector<16x128xf32>
    %280 = vector.extract_strided_slice %276 {offsets = [1, 0], sizes = [15, 128], strides = [1, 1]} : vector<16x128xf32> to vector<15x128xf32>
    %281 = tpu.concatenate %280, %277 in 0 : vector<15x128xf32>, vector<1x128xf32> -> vector<16x128xf32>
    %cst_158 = arith.constant 0.000000e+00 : f32
    %282 = vector.broadcast %cst_158 : f32 to vector<16x128xf32>
    %c1_i32_159 = arith.constant 1 : i32
    %283 = tpu.dynamic_rotate %279 by %c1_i32_159 dim 1 : vector<16x128xf32>, i32 -> vector<16x128xf32>
    %c68 = arith.constant 68 : index
    %c0_160 = arith.constant 0 : index
    %c0_161 = arith.constant 0 : index
    %284 = vector.load %arg2[%c68, %c0_160, %c0_161] : memref<77x16x128xf32, #tpu.memory_space<vmem>>, vector<1x16x128xf32>
    %285 = vector.shape_cast %284 : vector<1x16x128xf32> to vector<16x128xf32>
    %286 = arith.mulf %283, %285 : vector<16x128xf32>
    %287 = arith.addf %282, %286 : vector<16x128xf32>
    %c69 = arith.constant 69 : index
    %c0_162 = arith.constant 0 : index
    %c0_163 = arith.constant 0 : index
    %288 = vector.load %arg2[%c69, %c0_162, %c0_163] : memref<77x16x128xf32, #tpu.memory_space<vmem>>, vector<1x16x128xf32>
    %289 = vector.shape_cast %288 : vector<1x16x128xf32> to vector<16x128xf32>
    %290 = arith.mulf %279, %289 : vector<16x128xf32>
    %291 = arith.addf %287, %290 : vector<16x128xf32>
    %c127_i32_164 = arith.constant 127 : i32
    %292 = tpu.dynamic_rotate %279 by %c127_i32_164 dim 1 : vector<16x128xf32>, i32 -> vector<16x128xf32>
    %c70 = arith.constant 70 : index
    %c0_165 = arith.constant 0 : index
    %c0_166 = arith.constant 0 : index
    %293 = vector.load %arg2[%c70, %c0_165, %c0_166] : memref<77x16x128xf32, #tpu.memory_space<vmem>>, vector<1x16x128xf32>
    %294 = vector.shape_cast %293 : vector<1x16x128xf32> to vector<16x128xf32>
    %295 = arith.mulf %292, %294 : vector<16x128xf32>
    %296 = arith.addf %291, %295 : vector<16x128xf32>
    %c1_i32_167 = arith.constant 1 : i32
    %297 = tpu.dynamic_rotate %276 by %c1_i32_167 dim 1 : vector<16x128xf32>, i32 -> vector<16x128xf32>
    %c71 = arith.constant 71 : index
    %c0_168 = arith.constant 0 : index
    %c0_169 = arith.constant 0 : index
    %298 = vector.load %arg2[%c71, %c0_168, %c0_169] : memref<77x16x128xf32, #tpu.memory_space<vmem>>, vector<1x16x128xf32>
    %299 = vector.shape_cast %298 : vector<1x16x128xf32> to vector<16x128xf32>
    %300 = arith.mulf %297, %299 : vector<16x128xf32>
    %301 = arith.addf %296, %300 : vector<16x128xf32>
    %c72 = arith.constant 72 : index
    %c0_170 = arith.constant 0 : index
    %c0_171 = arith.constant 0 : index
    %302 = vector.load %arg2[%c72, %c0_170, %c0_171] : memref<77x16x128xf32, #tpu.memory_space<vmem>>, vector<1x16x128xf32>
    %303 = vector.shape_cast %302 : vector<1x16x128xf32> to vector<16x128xf32>
    %304 = arith.mulf %276, %303 : vector<16x128xf32>
    %305 = arith.addf %301, %304 : vector<16x128xf32>
    %c127_i32_172 = arith.constant 127 : i32
    %306 = tpu.dynamic_rotate %276 by %c127_i32_172 dim 1 : vector<16x128xf32>, i32 -> vector<16x128xf32>
    %c73 = arith.constant 73 : index
    %c0_173 = arith.constant 0 : index
    %c0_174 = arith.constant 0 : index
    %307 = vector.load %arg2[%c73, %c0_173, %c0_174] : memref<77x16x128xf32, #tpu.memory_space<vmem>>, vector<1x16x128xf32>
    %308 = vector.shape_cast %307 : vector<1x16x128xf32> to vector<16x128xf32>
    %309 = arith.mulf %306, %308 : vector<16x128xf32>
    %310 = arith.addf %305, %309 : vector<16x128xf32>
    %c1_i32_175 = arith.constant 1 : i32
    %311 = tpu.dynamic_rotate %281 by %c1_i32_175 dim 1 : vector<16x128xf32>, i32 -> vector<16x128xf32>
    %c74 = arith.constant 74 : index
    %c0_176 = arith.constant 0 : index
    %c0_177 = arith.constant 0 : index
    %312 = vector.load %arg2[%c74, %c0_176, %c0_177] : memref<77x16x128xf32, #tpu.memory_space<vmem>>, vector<1x16x128xf32>
    %313 = vector.shape_cast %312 : vector<1x16x128xf32> to vector<16x128xf32>
    %314 = arith.mulf %311, %313 : vector<16x128xf32>
    %315 = arith.addf %310, %314 : vector<16x128xf32>
    %c75 = arith.constant 75 : index
    %c0_178 = arith.constant 0 : index
    %c0_179 = arith.constant 0 : index
    %316 = vector.load %arg2[%c75, %c0_178, %c0_179] : memref<77x16x128xf32, #tpu.memory_space<vmem>>, vector<1x16x128xf32>
    %317 = vector.shape_cast %316 : vector<1x16x128xf32> to vector<16x128xf32>
    %318 = arith.mulf %281, %317 : vector<16x128xf32>
    %319 = arith.addf %315, %318 : vector<16x128xf32>
    %c127_i32_180 = arith.constant 127 : i32
    %320 = tpu.dynamic_rotate %281 by %c127_i32_180 dim 1 : vector<16x128xf32>, i32 -> vector<16x128xf32>
    %c76 = arith.constant 76 : index
    %c0_181 = arith.constant 0 : index
    %c0_182 = arith.constant 0 : index
    %321 = vector.load %arg2[%c76, %c0_181, %c0_182] : memref<77x16x128xf32, #tpu.memory_space<vmem>>, vector<1x16x128xf32>
    %322 = vector.shape_cast %321 : vector<1x16x128xf32> to vector<16x128xf32>
    %323 = arith.mulf %320, %322 : vector<16x128xf32>
    %324 = arith.addf %319, %323 : vector<16x128xf32>
    %c8 = arith.constant 8 : index
    %c0_183 = arith.constant 0 : index
    %c0_184 = arith.constant 0 : index
    %325 = vector.load %arg2[%c8, %c0_183, %c0_184] : memref<77x16x128xf32, #tpu.memory_space<vmem>>, vector<1x16x128xf32>
    %326 = vector.shape_cast %325 : vector<1x16x128xf32> to vector<16x128xf32>
    %327 = arith.mulf %324, %326 : vector<16x128xf32>
    %c18 = arith.constant 18 : index
    %c0_185 = arith.constant 0 : index
    %c0_186 = arith.constant 0 : index
    %328 = vector.load %arg2[%c18, %c0_185, %c0_186] : memref<77x16x128xf32, #tpu.memory_space<vmem>>, vector<1x16x128xf32>
    %329 = vector.shape_cast %328 : vector<1x16x128xf32> to vector<16x128xf32>
    %330 = arith.addf %327, %329 : vector<16x128xf32>
    %cst_187 = arith.constant 0.000000e+00 : f32
    %331 = vector.broadcast %cst_187 : f32 to vector<16x128xf32>
    %332 = arith.maximumf %330, %331 : vector<16x128xf32>
    %c45 = arith.constant 45 : index
    %c0_188 = arith.constant 0 : index
    %c0_189 = arith.constant 0 : index
    %333 = vector.load %arg2[%c45, %c0_188, %c0_189] : memref<77x16x128xf32, #tpu.memory_space<vmem>>, vector<1x16x128xf32>
    %334 = vector.shape_cast %333 : vector<1x16x128xf32> to vector<16x128xf32>
    %335 = arith.mulf %332, %334 : vector<16x128xf32>
    %c8_i32_190 = arith.constant 8 : i32
    %336 = tpu.dynamic_rotate %332 by %c8_i32_190 dim 1 : vector<16x128xf32>, i32 -> vector<16x128xf32>
    %c46 = arith.constant 46 : index
    %c0_191 = arith.constant 0 : index
    %c0_192 = arith.constant 0 : index
    %337 = vector.load %arg2[%c46, %c0_191, %c0_192] : memref<77x16x128xf32, #tpu.memory_space<vmem>>, vector<1x16x128xf32>
    %338 = vector.shape_cast %337 : vector<1x16x128xf32> to vector<16x128xf32>
    %339 = arith.mulf %336, %338 : vector<16x128xf32>
    %340 = arith.addf %335, %339 : vector<16x128xf32>
    %c112_i32_193 = arith.constant 112 : i32
    %341 = tpu.dynamic_rotate %332 by %c112_i32_193 dim 1 : vector<16x128xf32>, i32 -> vector<16x128xf32>
    %c47 = arith.constant 47 : index
    %c0_194 = arith.constant 0 : index
    %c0_195 = arith.constant 0 : index
    %342 = vector.load %arg2[%c47, %c0_194, %c0_195] : memref<77x16x128xf32, #tpu.memory_space<vmem>>, vector<1x16x128xf32>
    %343 = vector.shape_cast %342 : vector<1x16x128xf32> to vector<16x128xf32>
    %344 = arith.mulf %341, %343 : vector<16x128xf32>
    %345 = arith.addf %340, %344 : vector<16x128xf32>
    %c16_i32_196 = arith.constant 16 : i32
    %346 = tpu.dynamic_rotate %332 by %c16_i32_196 dim 1 : vector<16x128xf32>, i32 -> vector<16x128xf32>
    %c48 = arith.constant 48 : index
    %c0_197 = arith.constant 0 : index
    %c0_198 = arith.constant 0 : index
    %347 = vector.load %arg2[%c48, %c0_197, %c0_198] : memref<77x16x128xf32, #tpu.memory_space<vmem>>, vector<1x16x128xf32>
    %348 = vector.shape_cast %347 : vector<1x16x128xf32> to vector<16x128xf32>
    %349 = arith.mulf %346, %348 : vector<16x128xf32>
    %350 = arith.addf %345, %349 : vector<16x128xf32>
    %c120_i32_199 = arith.constant 120 : i32
    %351 = tpu.dynamic_rotate %332 by %c120_i32_199 dim 1 : vector<16x128xf32>, i32 -> vector<16x128xf32>
    %c49 = arith.constant 49 : index
    %c0_200 = arith.constant 0 : index
    %c0_201 = arith.constant 0 : index
    %352 = vector.load %arg2[%c49, %c0_200, %c0_201] : memref<77x16x128xf32, #tpu.memory_space<vmem>>, vector<1x16x128xf32>
    %353 = vector.shape_cast %352 : vector<1x16x128xf32> to vector<16x128xf32>
    %354 = arith.mulf %351, %353 : vector<16x128xf32>
    %355 = arith.addf %350, %354 : vector<16x128xf32>
    %c9 = arith.constant 9 : index
    %c0_202 = arith.constant 0 : index
    %c0_203 = arith.constant 0 : index
    %356 = vector.load %arg2[%c9, %c0_202, %c0_203] : memref<77x16x128xf32, #tpu.memory_space<vmem>>, vector<1x16x128xf32>
    %357 = vector.shape_cast %356 : vector<1x16x128xf32> to vector<16x128xf32>
    %358 = arith.mulf %355, %357 : vector<16x128xf32>
    %c19 = arith.constant 19 : index
    %c0_204 = arith.constant 0 : index
    %c0_205 = arith.constant 0 : index
    %359 = vector.load %arg2[%c19, %c0_204, %c0_205] : memref<77x16x128xf32, #tpu.memory_space<vmem>>, vector<1x16x128xf32>
    %360 = vector.shape_cast %359 : vector<1x16x128xf32> to vector<16x128xf32>
    %361 = arith.addf %358, %360 : vector<16x128xf32>
    %362 = arith.addf %361, %245 : vector<16x128xf32>
    %cst_206 = arith.constant 0.000000e+00 : f32
    %363 = vector.broadcast %cst_206 : f32 to vector<16x128xf32>
    %364 = arith.maximumf %362, %363 : vector<16x128xf32>
    %cst_207 = arith.constant 0.000000e+00 : f32
    %365 = vector.broadcast %cst_207 : f32 to vector<1x128xf32>
    %366 = vector.extract_strided_slice %364 {offsets = [0, 0], sizes = [15, 128], strides = [1, 1]} : vector<16x128xf32> to vector<15x128xf32>
    %367 = tpu.concatenate %365, %366 in 0 : vector<1x128xf32>, vector<15x128xf32> -> vector<16x128xf32>
    %368 = vector.extract_strided_slice %364 {offsets = [1, 0], sizes = [15, 128], strides = [1, 1]} : vector<16x128xf32> to vector<15x128xf32>
    %369 = tpu.concatenate %368, %365 in 0 : vector<15x128xf32>, vector<1x128xf32> -> vector<16x128xf32>
    %370 = tpu.concatenate %367, %364, %369 in 1 : vector<16x128xf32>, vector<16x128xf32>, vector<16x128xf32> -> vector<16x384xf32>
    %c0_208 = arith.constant 0 : index
    %c0_209 = arith.constant 0 : index
    %371 = vector.load %arg3[%c0_208, %c0_209] : memref<15x384xf32, #tpu.memory_space<vmem>>, vector<15x384xf32>
    %cst_210 = arith.constant dense<0.000000e+00> : vector<15x16xf32>
    %372 = tpu.matmul %371, %370, %cst_210 {dimension_numbers = #tpu.dot_dimension_numbers<[1], [1], [0], [0], [0, 0, 1, 0], [], []>} : vector<15x384xf32>, vector<16x384xf32>, vector<15x16xf32> -> vector<15x16xf32>
    %c0_211 = arith.constant 0 : index
    %c0_212 = arith.constant 0 : index
    %c0_213 = arith.constant 0 : index
    %373 = vector.load %arg4[%c0_211, %c0_212, %c0_213] : memref<8x16x16xf32, #tpu.memory_space<vmem>>, vector<1x16x16xf32>
    %374 = vector.shape_cast %373 : vector<1x16x16xf32> to vector<16x16xf32>
    %cst_214 = arith.constant dense<0.000000e+00> : vector<15x16xf32>
    %375 = tpu.matmul %372, %374, %cst_214 {dimension_numbers = #tpu.dot_dimension_numbers<[1], [0], [0], [1], [0, 0, 1, 1], [], []>} : vector<15x16xf32>, vector<16x16xf32>, vector<15x16xf32> -> vector<15x16xf32>
    %c0_215 = arith.constant 0 : index
    %c0_216 = arith.constant 0 : index
    %c0_217 = arith.constant 0 : index
    %376 = vector.load %arg5[%c0_215, %c0_216, %c0_217] : memref<9x15x16xf32, #tpu.memory_space<vmem>>, vector<1x15x16xf32>
    %377 = vector.shape_cast %376 : vector<1x15x16xf32> to vector<15x16xf32>
    %378 = arith.addf %375, %377 : vector<15x16xf32>
    %cst_218 = arith.constant 0.000000e+00 : f32
    %379 = vector.broadcast %cst_218 : f32 to vector<15x16xf32>
    %380 = arith.maximumf %378, %379 : vector<15x16xf32>
    %c1_219 = arith.constant 1 : index
    %c0_220 = arith.constant 0 : index
    %c0_221 = arith.constant 0 : index
    %381 = vector.load %arg4[%c1_219, %c0_220, %c0_221] : memref<8x16x16xf32, #tpu.memory_space<vmem>>, vector<1x16x16xf32>
    %382 = vector.shape_cast %381 : vector<1x16x16xf32> to vector<16x16xf32>
    %cst_222 = arith.constant dense<0.000000e+00> : vector<15x16xf32>
    %383 = tpu.matmul %380, %382, %cst_222 {dimension_numbers = #tpu.dot_dimension_numbers<[1], [0], [0], [1], [0, 0, 1, 1], [], []>} : vector<15x16xf32>, vector<16x16xf32>, vector<15x16xf32> -> vector<15x16xf32>
    %c1_223 = arith.constant 1 : index
    %c0_224 = arith.constant 0 : index
    %c0_225 = arith.constant 0 : index
    %384 = vector.load %arg5[%c1_223, %c0_224, %c0_225] : memref<9x15x16xf32, #tpu.memory_space<vmem>>, vector<1x15x16xf32>
    %385 = vector.shape_cast %384 : vector<1x15x16xf32> to vector<15x16xf32>
    %386 = arith.addf %383, %385 : vector<15x16xf32>
    %cst_226 = arith.constant 0.000000e+00 : f32
    %387 = vector.broadcast %cst_226 : f32 to vector<15x16xf32>
    %388 = arith.maximumf %386, %387 : vector<15x16xf32>
    %c2_227 = arith.constant 2 : index
    %c0_228 = arith.constant 0 : index
    %c0_229 = arith.constant 0 : index
    %389 = vector.load %arg4[%c2_227, %c0_228, %c0_229] : memref<8x16x16xf32, #tpu.memory_space<vmem>>, vector<1x16x16xf32>
    %390 = vector.shape_cast %389 : vector<1x16x16xf32> to vector<16x16xf32>
    %cst_230 = arith.constant dense<0.000000e+00> : vector<15x16xf32>
    %391 = tpu.matmul %388, %390, %cst_230 {dimension_numbers = #tpu.dot_dimension_numbers<[1], [0], [0], [1], [0, 0, 1, 1], [], []>} : vector<15x16xf32>, vector<16x16xf32>, vector<15x16xf32> -> vector<15x16xf32>
    %c2_231 = arith.constant 2 : index
    %c0_232 = arith.constant 0 : index
    %c0_233 = arith.constant 0 : index
    %392 = vector.load %arg5[%c2_231, %c0_232, %c0_233] : memref<9x15x16xf32, #tpu.memory_space<vmem>>, vector<1x15x16xf32>
    %393 = vector.shape_cast %392 : vector<1x15x16xf32> to vector<15x16xf32>
    %394 = arith.addf %391, %393 : vector<15x16xf32>
    %cst_234 = arith.constant 0.000000e+00 : f32
    %395 = vector.broadcast %cst_234 : f32 to vector<15x16xf32>
    %396 = arith.maximumf %394, %395 : vector<15x16xf32>
    %c3_235 = arith.constant 3 : index
    %c0_236 = arith.constant 0 : index
    %c0_237 = arith.constant 0 : index
    %397 = vector.load %arg4[%c3_235, %c0_236, %c0_237] : memref<8x16x16xf32, #tpu.memory_space<vmem>>, vector<1x16x16xf32>
    %398 = vector.shape_cast %397 : vector<1x16x16xf32> to vector<16x16xf32>
    %cst_238 = arith.constant dense<0.000000e+00> : vector<15x16xf32>
    %399 = tpu.matmul %396, %398, %cst_238 {dimension_numbers = #tpu.dot_dimension_numbers<[1], [0], [0], [1], [0, 0, 1, 1], [], []>} : vector<15x16xf32>, vector<16x16xf32>, vector<15x16xf32> -> vector<15x16xf32>
    %c3_239 = arith.constant 3 : index
    %c0_240 = arith.constant 0 : index
    %c0_241 = arith.constant 0 : index
    %400 = vector.load %arg5[%c3_239, %c0_240, %c0_241] : memref<9x15x16xf32, #tpu.memory_space<vmem>>, vector<1x15x16xf32>
    %401 = vector.shape_cast %400 : vector<1x15x16xf32> to vector<15x16xf32>
    %402 = arith.addf %399, %401 : vector<15x16xf32>
    %cst_242 = arith.constant 0.000000e+00 : f32
    %403 = vector.broadcast %cst_242 : f32 to vector<15x16xf32>
    %404 = arith.maximumf %402, %403 : vector<15x16xf32>
    %c4_243 = arith.constant 4 : index
    %c0_244 = arith.constant 0 : index
    %c0_245 = arith.constant 0 : index
    %405 = vector.load %arg4[%c4_243, %c0_244, %c0_245] : memref<8x16x16xf32, #tpu.memory_space<vmem>>, vector<1x16x16xf32>
    %406 = vector.shape_cast %405 : vector<1x16x16xf32> to vector<16x16xf32>
    %cst_246 = arith.constant dense<0.000000e+00> : vector<15x16xf32>
    %407 = tpu.matmul %404, %406, %cst_246 {dimension_numbers = #tpu.dot_dimension_numbers<[1], [0], [0], [1], [0, 0, 1, 1], [], []>} : vector<15x16xf32>, vector<16x16xf32>, vector<15x16xf32> -> vector<15x16xf32>
    %c4_247 = arith.constant 4 : index
    %c0_248 = arith.constant 0 : index
    %c0_249 = arith.constant 0 : index
    %408 = vector.load %arg5[%c4_247, %c0_248, %c0_249] : memref<9x15x16xf32, #tpu.memory_space<vmem>>, vector<1x15x16xf32>
    %409 = vector.shape_cast %408 : vector<1x15x16xf32> to vector<15x16xf32>
    %410 = arith.addf %407, %409 : vector<15x16xf32>
    %cst_250 = arith.constant 0.000000e+00 : f32
    %411 = vector.broadcast %cst_250 : f32 to vector<15x16xf32>
    %412 = arith.maximumf %410, %411 : vector<15x16xf32>
    %c5_251 = arith.constant 5 : index
    %c0_252 = arith.constant 0 : index
    %c0_253 = arith.constant 0 : index
    %413 = vector.load %arg4[%c5_251, %c0_252, %c0_253] : memref<8x16x16xf32, #tpu.memory_space<vmem>>, vector<1x16x16xf32>
    %414 = vector.shape_cast %413 : vector<1x16x16xf32> to vector<16x16xf32>
    %cst_254 = arith.constant dense<0.000000e+00> : vector<15x16xf32>
    %415 = tpu.matmul %412, %414, %cst_254 {dimension_numbers = #tpu.dot_dimension_numbers<[1], [0], [0], [1], [0, 0, 1, 1], [], []>} : vector<15x16xf32>, vector<16x16xf32>, vector<15x16xf32> -> vector<15x16xf32>
    %c5_255 = arith.constant 5 : index
    %c0_256 = arith.constant 0 : index
    %c0_257 = arith.constant 0 : index
    %416 = vector.load %arg5[%c5_255, %c0_256, %c0_257] : memref<9x15x16xf32, #tpu.memory_space<vmem>>, vector<1x15x16xf32>
    %417 = vector.shape_cast %416 : vector<1x15x16xf32> to vector<15x16xf32>
    %418 = arith.addf %415, %417 : vector<15x16xf32>
    %cst_258 = arith.constant 0.000000e+00 : f32
    %419 = vector.broadcast %cst_258 : f32 to vector<15x16xf32>
    %420 = arith.maximumf %418, %419 : vector<15x16xf32>
    %c6_259 = arith.constant 6 : index
    %c0_260 = arith.constant 0 : index
    %c0_261 = arith.constant 0 : index
    %421 = vector.load %arg4[%c6_259, %c0_260, %c0_261] : memref<8x16x16xf32, #tpu.memory_space<vmem>>, vector<1x16x16xf32>
    %422 = vector.shape_cast %421 : vector<1x16x16xf32> to vector<16x16xf32>
    %cst_262 = arith.constant dense<0.000000e+00> : vector<15x16xf32>
    %423 = tpu.matmul %420, %422, %cst_262 {dimension_numbers = #tpu.dot_dimension_numbers<[1], [0], [0], [1], [0, 0, 1, 1], [], []>} : vector<15x16xf32>, vector<16x16xf32>, vector<15x16xf32> -> vector<15x16xf32>
    %c6_263 = arith.constant 6 : index
    %c0_264 = arith.constant 0 : index
    %c0_265 = arith.constant 0 : index
    %424 = vector.load %arg5[%c6_263, %c0_264, %c0_265] : memref<9x15x16xf32, #tpu.memory_space<vmem>>, vector<1x15x16xf32>
    %425 = vector.shape_cast %424 : vector<1x15x16xf32> to vector<15x16xf32>
    %426 = arith.addf %423, %425 : vector<15x16xf32>
    %cst_266 = arith.constant 0.000000e+00 : f32
    %427 = vector.broadcast %cst_266 : f32 to vector<15x16xf32>
    %428 = arith.maximumf %426, %427 : vector<15x16xf32>
    %c7_267 = arith.constant 7 : index
    %c0_268 = arith.constant 0 : index
    %c0_269 = arith.constant 0 : index
    %429 = vector.load %arg4[%c7_267, %c0_268, %c0_269] : memref<8x16x16xf32, #tpu.memory_space<vmem>>, vector<1x16x16xf32>
    %430 = vector.shape_cast %429 : vector<1x16x16xf32> to vector<16x16xf32>
    %cst_270 = arith.constant dense<0.000000e+00> : vector<15x16xf32>
    %431 = tpu.matmul %428, %430, %cst_270 {dimension_numbers = #tpu.dot_dimension_numbers<[1], [0], [0], [1], [0, 0, 1, 1], [], []>} : vector<15x16xf32>, vector<16x16xf32>, vector<15x16xf32> -> vector<15x16xf32>
    %c7_271 = arith.constant 7 : index
    %c0_272 = arith.constant 0 : index
    %c0_273 = arith.constant 0 : index
    %432 = vector.load %arg5[%c7_271, %c0_272, %c0_273] : memref<9x15x16xf32, #tpu.memory_space<vmem>>, vector<1x15x16xf32>
    %433 = vector.shape_cast %432 : vector<1x15x16xf32> to vector<15x16xf32>
    %434 = arith.addf %431, %433 : vector<15x16xf32>
    %435 = arith.negf %434 : vector<15x16xf32>
    %436 = math.exp %435 : vector<15x16xf32>
    %cst_274 = arith.constant 1.000000e+00 : f32
    %437 = vector.broadcast %cst_274 : f32 to vector<15x16xf32>
    %438 = arith.addf %437, %436 : vector<15x16xf32>
    %439 = arith.divf %437, %438 : vector<15x16xf32>
    %c8_275 = arith.constant 8 : index
    %c0_276 = arith.constant 0 : index
    %c0_277 = arith.constant 0 : index
    %440 = vector.load %arg5[%c8_275, %c0_276, %c0_277] : memref<9x15x16xf32, #tpu.memory_space<vmem>>, vector<1x15x16xf32>
    %441 = vector.shape_cast %440 : vector<1x15x16xf32> to vector<15x16xf32>
    %442 = arith.addf %439, %441 : vector<15x16xf32>
    %c0_278 = arith.constant 0 : index
    %c0_279 = arith.constant 0 : index
    %c0_280 = arith.constant 0 : index
    %443 = vector.load %arg6[%c0_278, %c0_279, %c0_280] : memref<1x15x16xf32, #tpu.memory_space<vmem>>, vector<1x15x16xf32>
    %444 = vector.shape_cast %443 : vector<1x15x16xf32> to vector<15x16xf32>
    %445 = vector.shape_cast %442 : vector<15x16xf32> to vector<1x15x16xf32>
    tpu.vector_store %arg6[%c0_278, %c0_279, %c0_280], %445 {strides = array<i32>} : memref<1x15x16xf32, #tpu.memory_space<vmem>>, vector<1x15x16xf32>,
    return
  }
  func.func @transform_0(%arg0: i32) -> (i32, i32, i32) {
    %c0_i32 = arith.constant 0 : i32
    %c0_i32_0 = arith.constant 0 : i32
    %c0_i32_1 = arith.constant 0 : i32
    return %arg0, %c0_i32, %c0_i32_0 : i32, i32, i32
  }
  func.func @transform_1(%arg0: i32) -> (i32, i32, i32) {
    %c0_i32 = arith.constant 0 : i32
    %c0_i32_0 = arith.constant 0 : i32
    %c0_i32_1 = arith.constant 0 : i32
    %c0_i32_2 = arith.constant 0 : i32
    return %c0_i32, %c0_i32_0, %c0_i32_1 : i32, i32, i32
  }
  func.func @transform_2(%arg0: i32) -> (i32, i32) {
    %c0_i32 = arith.constant 0 : i32
    %c0_i32_0 = arith.constant 0 : i32
    %c0_i32_1 = arith.constant 0 : i32
    return %c0_i32, %c0_i32_0 : i32, i32
  }
  func.func @transform_3(%arg0: i32) -> (i32, i32, i32) {
    %c0_i32 = arith.constant 0 : i32
    %c0_i32_0 = arith.constant 0 : i32
    %c0_i32_1 = arith.constant 0 : i32
    %c0_i32_2 = arith.constant 0 : i32
    return %c0_i32, %c0_i32_0, %c0_i32_1 : i32, i32, i32
  }
  func.func @transform_4(%arg0: i32) -> (i32, i32, i32) {
    %c0_i32 = arith.constant 0 : i32
    %c0_i32_0 = arith.constant 0 : i32
    %c0_i32_1 = arith.constant 0 : i32
    %c0_i32_2 = arith.constant 0 : i32
    return %c0_i32, %c0_i32_0, %c0_i32_1 : i32, i32, i32
  }
  func.func @transform_5(%arg0: i32) -> (i32, i32, i32) {
    %c0_i32 = arith.constant 0 : i32
    %c0_i32_0 = arith.constant 0 : i32
    %c0_i32_1 = arith.constant 0 : i32
    return %arg0, %c0_i32, %c0_i32_0 : i32, i32, i32
  }
}

</mosaic_0001>

<llo_original>
// kernel: freq_conv_proposal_single_side.1
$region0: #{freq_conv_proposal_single_side.1}
  #allocation0 [shape = 'u32[]', space=smem, size = 0x4, offset = 0x4, fixed_abs, tag = 'smem constant byte address 0x4 - core index']
  #allocation1 [shape = 'u32[72,128]{1,0:T(1,128)}', space=vmem, size = 0x9000, scoped, tag = 'internal scratch']
  %s0 = inlined_call_operand.vmem [shape: f32[2,16,128], index: 0, kind: input, shape index: {}]
  %s1 = inlined_call_operand.hbm [shape: f32[77,16,128], index: 1, kind: input, shape index: {}]
  %s2 = inlined_call_operand.vmem [shape: f32[15,384], index: 2, kind: input, shape index: {}]
  %s3 = inlined_call_operand.vmem [shape: f32[8,16,16], index: 3, kind: input, shape index: {}]
  %s4 = inlined_call_operand.vmem [shape: f32[9,15,16], index: 4, kind: input, shape index: {}]
  %s5 = inlined_call_operand.vmem [shape: f32[2,15,16], index: 5, kind: output, shape index: {}]
  %s6 = sld [smem:[#allocation0]]
  $region57: #{freq_conv_proposal_single_side.1} parent=0
    _
  %s8 = ssub.s32 1, %s6
  %s9 = scalar_select 0, %s8, %s6
  $region1: #{freq_conv_proposal_single_side.1} parent=0
    #allocation2 [shape = 'u8[630784]{0}', space=vmem, size = 0x9a000, scoped, tag = 'input window, operand 1, single buffered']
    #allocation3 [shape = 's32[2]{0}', space=sflag, size = 0x8, scoped, tag = 'scoped memory for freq_conv_proposal_single_side.1']
    %10 = vsyncpa [#allocation3], 0
    loop: start=0, step=1, limit=4
    $region2: #{freq_conv_proposal_single_side.1} parent=1 // loop_pre_header
      _
    $region3: #{freq_conv_proposal_single_side.1} parent=1 // loop_header
      %s12 = sphi 0, %s16
      %p13 = scmp.ge.s32.totalorder %s12, 4
      %s22 = sphi 0, %s24
      %s25 = sphi 0, %s22
      %s26 = sphi 0, %s25
      %s42 = sphi 0, %s26
      %s46 = sphi 0, %s46
      %s48 = sphi 0, %s46
      %s49 = sphi 0, %s48
      %s63 = sphi 0, %s49
      %s67 = sphi 0, %s67
      %s69 = sphi 0, %s67
      %s70 = sphi 0, %s69
      %s84 = sphi 0, %s70
      %s88 = sphi 0, %s88
      %s90 = sphi 0, %s88
      %s91 = sphi 0, %s90
      %s105 = sphi 0, %s91
      %s109 = sphi 0, %s109
      %s111 = sphi 0, %s109
      %s112 = sphi 0, %s111
      %s126 = sphi 0, %s112
      %s132 = sphi 0, %s134
      %s135 = sphi 0, %s132
      %s136 = sphi 0, %s135
      %s152 = sphi 0, %s136
    $region4: #{freq_conv_proposal_single_side.1} parent=1 // loop_header_branch
      %15 = sbr.rel (%p13) target = $region8
    $region5: #{freq_conv_proposal_single_side.1} parent=1 // loop_body
      %s17 = ssub.s32 %s12, 1
      %s18 = ssub.s32 %s12, 2
      %s19 = sadd.s32 %s12, 1
      %s20 = ssub.s32 %s12, %s19
      %p21 = scmp.eq.s32.totalorder %s20, 0
      %s23 = sadd.s32 %s22, 1
      %s24 = scalar_select %p21, %s22, %s23
      %p27 = pneg %p21
      %p28 = scmp.eq.s32.totalorder %s12, 1
      %p29 = por %p27, %p28
      %p30 = scmp.ne.s32.totalorder %s22, %s25
      %p31 = scmp.eq.s32.totalorder %s12, 0
      %p32 = por %p30, %p31
      %p33 = scmp.ne.s32.totalorder %s22, %s25
      %p34 = scmp.eq.s32.totalorder %s17, 1
      %p35 = por %p33, %p34
      %p36 = scmp.ne.s32.totalorder %s25, %s26
      %p37 = scmp.eq.s32.totalorder %s17, 0
      %p38 = por %p36, %p37
      %p39 = scmp.ne.s32.totalorder %s25, %s26
      %p40 = scmp.eq.s32.totalorder %s18, 1
      %p41 = por %p39, %p40
      %p43 = scmp.ne.s32.totalorder %s26, %s42
      %p44 = scmp.eq.s32.totalorder %s18, 0
      %p45 = por %p43, %p44
      %s47 = sadd.s32 %s46, 1
      %p50 = scmp.eq.s32.totalorder %s12, 1
      %p51 = scmp.ne.s32.totalorder %s46, %s48
      %p52 = scmp.eq.s32.totalorder %s12, 0
      %p53 = por %p51, %p52
      %p54 = scmp.ne.s32.totalorder %s46, %s48
      %p55 = scmp.eq.s32.totalorder %s17, 1
      %p56 = por %p54, %p55
      %p57 = scmp.ne.s32.totalorder %s48, %s49
      %p58 = scmp.eq.s32.totalorder %s17, 0
      %p59 = por %p57, %p58
      %p60 = scmp.ne.s32.totalorder %s48, %s49
      %p61 = scmp.eq.s32.totalorder %s18, 1
      %p62 = por %p60, %p61
      %p64 = scmp.ne.s32.totalorder %s49, %s63
      %p65 = scmp.eq.s32.totalorder %s18, 0
      %p66 = por %p64, %p65
      %s68 = sadd.s32 %s67, 1
      %p71 = scmp.eq.s32.totalorder %s12, 1
      %p72 = scmp.ne.s32.totalorder %s67, %s69
      %p73 = scmp.eq.s32.totalorder %s12, 0
      %p74 = por %p72, %p73
      %p75 = scmp.ne.s32.totalorder %s67, %s69
      %p76 = scmp.eq.s32.totalorder %s17, 1
      %p77 = por %p75, %p76
      %p78 = scmp.ne.s32.totalorder %s69, %s70
      %p79 = scmp.eq.s32.totalorder %s17, 0
      %p80 = por %p78, %p79
      %p81 = scmp.ne.s32.totalorder %s69, %s70
      %p82 = scmp.eq.s32.totalorder %s18, 1
      %p83 = por %p81, %p82
      %p85 = scmp.ne.s32.totalorder %s70, %s84
      %p86 = scmp.eq.s32.totalorder %s18, 0
      %p87 = por %p85, %p86
      %s89 = sadd.s32 %s88, 1
      %p92 = scmp.eq.s32.totalorder %s12, 1
      %p93 = scmp.ne.s32.totalorder %s88, %s90
      %p94 = scmp.eq.s32.totalorder %s12, 0
      %p95 = por %p93, %p94
      %p96 = scmp.ne.s32.totalorder %s88, %s90
      %p97 = scmp.eq.s32.totalorder %s17, 1
      %p98 = por %p96, %p97
      %p99 = scmp.ne.s32.totalorder %s90, %s91
      %p100 = scmp.eq.s32.totalorder %s17, 0
      %p101 = por %p99, %p100
      %p102 = scmp.ne.s32.totalorder %s90, %s91
      %p103 = scmp.eq.s32.totalorder %s18, 1
      %p104 = por %p102, %p103
      %p106 = scmp.ne.s32.totalorder %s91, %s105
      %p107 = scmp.eq.s32.totalorder %s18, 0
      %p108 = por %p106, %p107
      %s110 = sadd.s32 %s109, 1
      %p113 = scmp.eq.s32.totalorder %s12, 1
      %p114 = scmp.ne.s32.totalorder %s109, %s111
      %p115 = scmp.eq.s32.totalorder %s12, 0
      %p116 = por %p114, %p115
      %p117 = scmp.ne.s32.totalorder %s109, %s111
      %p118 = scmp.eq.s32.totalorder %s17, 1
      %p119 = por %p117, %p118
      %p120 = scmp.ne.s32.totalorder %s111, %s112
      %p121 = scmp.eq.s32.totalorder %s17, 0
      %p122 = por %p120, %p121
      %p123 = scmp.ne.s32.totalorder %s111, %s112
      %p124 = scmp.eq.s32.totalorder %s18, 1
      %p125 = por %p123, %p124
      %p127 = scmp.ne.s32.totalorder %s112, %s126
      %p128 = scmp.eq.s32.totalorder %s18, 0
      %p129 = por %p127, %p128
      %s130 = ssub.s32 %s12, %s19
      %p131 = scmp.eq.s32.totalorder %s130, 0
      %s133 = sadd.s32 %s132, 1
      %s134 = scalar_select %p131, %s132, %s133
      %p137 = pneg %p131
      %p138 = scmp.eq.s32.totalorder %s12, 1
      %p139 = por %p137, %p138
      %p140 = scmp.ne.s32.totalorder %s132, %s135
      %p141 = scmp.eq.s32.totalorder %s12, 0
      %p142 = por %p140, %p141
      %p143 = scmp.ne.s32.totalorder %s132, %s135
      %p144 = scmp.eq.s32.totalorder %s17, 1
      %p145 = por %p143, %p144
      %p146 = scmp.ne.s32.totalorder %s135, %s136
      %p147 = scmp.eq.s32.totalorder %s17, 0
      %p148 = por %p146, %p147
      %p149 = scmp.ne.s32.totalorder %s135, %s136
      %p150 = scmp.eq.s32.totalorder %s18, 1
      %p151 = por %p149, %p150
      %p153 = scmp.ne.s32.totalorder %s136, %s152
      %p154 = scmp.eq.s32.totalorder %s18, 0
      %p155 = por %p153, %p154
      %p156 = scmp.le.s32.totalorder 1, %s12
      %p157 = scmp.lt.s32.totalorder %s12, 3
      %p158 = pnand %p156, %p157
      %p159 = pneg %p158
      // Predicated region
      $region9: #{freq_conv_proposal_single_side.1} parent=5 // pred_check
        _
      $region10: #{freq_conv_proposal_single_side.1} parent=5 // pred_check_branch
        %161 = sbr.rel (%p158) target = $region12
      $region11: #{freq_conv_proposal_single_side.1} parent=5 // pred_region
        %s162 = ssub.s32 %s12, 1
        // Predicated region
        $region13: #{freq_conv_proposal_single_side.1} parent=11 // pred_check
          %p163 = pneg %p59
        $region14: #{freq_conv_proposal_single_side.1} parent=11 // pred_check_branch
          %165 = sbr.rel (%p163) target = $region16
        $region15: #{freq_conv_proposal_single_side.1} parent=11 // pred_region
          %167 = vsyncadd [#allocation3], 0
          %s168 = sshll.u32 %s1, 4
          %s169 = int_to_ptr.hbm [resolvable:$true] %s168
          %s170 = sshll.u32 [#allocation2], 4
          %s171 = int_to_ptr.vmem [resolvable:$true] %s170
          %176 = dma.hbm_to_vmem [thread:$0]  %s169, 19712, %s171, [#allocation3], 128, 128, 8
        $region16: #{freq_conv_proposal_single_side.1} parent=11 // pred_fallthru
          _
        // Predicated region
        $region17: #{freq_conv_proposal_single_side.1} parent=11 // pred_check
          %p177 = pneg %p80
        $region18: #{freq_conv_proposal_single_side.1} parent=11 // pred_check_branch
          %179 = sbr.rel (%p177) target = $region20
        $region19: #{freq_conv_proposal_single_side.1} parent=11 // pred_region
          _
        $region20: #{freq_conv_proposal_single_side.1} parent=11 // pred_fallthru
          _
        // Predicated region
        $region21: #{freq_conv_proposal_single_side.1} parent=11 // pred_check
          %p180 = pneg %p101
        $region22: #{freq_conv_proposal_single_side.1} parent=11 // pred_check_branch
          %182 = sbr.rel (%p180) target = $region24
        $region23: #{freq_conv_proposal_single_side.1} parent=11 // pred_region
          _
        $region24: #{freq_conv_proposal_single_side.1} parent=11 // pred_fallthru
          _
        // Predicated region
        $region25: #{freq_conv_proposal_single_side.1} parent=11 // pred_check
          %p183 = pneg %p122
        $region26: #{freq_conv_proposal_single_side.1} parent=11 // pred_check_branch
          %185 = sbr.rel (%p183) target = $region28
        $region27: #{freq_conv_proposal_single_side.1} parent=11 // pred_region
          _
        $region28: #{freq_conv_proposal_single_side.1} parent=11 // pred_fallthru
          _
      $region12: #{freq_conv_proposal_single_side.1} parent=5 // pred_fallthru
        _
      %p186 = scmp.lt.s32.totalorder %s12, 2
      // Predicated region
      $region29: #{freq_conv_proposal_single_side.1} parent=5 // pred_check
        %p187 = pneg %p186
      $region30: #{freq_conv_proposal_single_side.1} parent=5 // pred_check_branch
        %189 = sbr.rel (%p187) target = $region32
      $region31: #{freq_conv_proposal_single_side.1} parent=5 // pred_region
        // Predicated region
        $region33: #{freq_conv_proposal_single_side.1} parent=31 // pred_check
          %p190 = pneg %p32
        $region34: #{freq_conv_proposal_single_side.1} parent=31 // pred_check_branch
          %192 = sbr.rel (%p190) target = $region36
        $region35: #{freq_conv_proposal_single_side.1} parent=31 // pred_region
          %p193 = scmp.lt.s32.totalorder %s12, 1
          %s194 = scalar_select %p193, %s12, 1
          %s195 = smul.addr %s194, 2
          %s196 = smul.addr %s195, 8
          %s197 = scalar_lea.vmem %s0, %s196
        $region36: #{freq_conv_proposal_single_side.1} parent=31 // pred_fallthru
          _
      $region32: #{freq_conv_proposal_single_side.1} parent=5 // pred_fallthru
        _
      %p198 = scmp.le.s32.totalorder 1, %s12
      %p199 = scmp.lt.s32.totalorder %s12, 3
      %p200 = pnand %p198, %p199
      %p201 = pneg %p200
      // Predicated region
      $region37: #{freq_conv_proposal_single_side.1} parent=5 // pred_check
        _
      $region38: #{freq_conv_proposal_single_side.1} parent=5 // pred_check_branch
        %203 = sbr.rel (%p200) target = $region40
      $region39: #{freq_conv_proposal_single_side.1} parent=5 // pred_region
        %s204 = ssub.s32 %s12, 1
        // Predicated region
        $region41: #{freq_conv_proposal_single_side.1} parent=39 // pred_check
          %p205 = pneg %p59
        $region42: #{freq_conv_proposal_single_side.1} parent=39 // pred_check_branch
          %207 = sbr.rel (%p205) target = $region44
        $region43: #{freq_conv_proposal_single_side.1} parent=39 // pred_region
          %209 = dma.done [#allocation3], 19712
        $region44: #{freq_conv_proposal_single_side.1} parent=39 // pred_fallthru
          _
        %p210 = scmp.lt.s32.totalorder %s17, 1
        %s211 = scalar_select %p210, %s17, 1
        %s212 = smul.addr %s211, 2
        %s213 = smul.addr %s212, 8
        %s214 = scalar_lea.vmem %s0, %s213
        %p215 = pneg %p38
        %p216 = pneg %p35
        %p217 = pneg %p59
        %p218 = pneg %p56
        %p219 = pneg %p80
        %p220 = pneg %p77
        %p221 = pneg %p101
        %p222 = pneg %p98
        %p223 = pneg %p122
        %p224 = pneg %p119
        %p225 = pneg %p148
        %p226 = pneg %p145
        %p227 = scmp.lt.s32.totalorder %s17, 1
        %s228 = scalar_select %p227, %s17, 1
        %s229 = smul.addr %s228, 2
        %s230 = smul.addr %s229, 8
        %s231 = scalar_lea.vmem %s5, %s230
        %p232 = scmp.lt.s32.totalorder %s17, 1
        %s233 = scalar_select %p232, %s17, 1
        %s234 = smul.addr %s233, 2
        %s235 = smul.addr %s234, 8
        %s236 = scalar_lea.vmem %s0, %s235
        %p237 = scmp.lt.s32.totalorder %s17, 1
        %s238 = scalar_select %p237, %s17, 1
        %s239 = smul.addr %s238, 2
        %s240 = smul.addr %s239, 8
        %s241 = scalar_lea.vmem %s5, %s240
        %v242 = vld [vmem:[%s236] sm:$0xff]
        %v243 = vld [vmem:[%s236 + $0x8] sm:$0xff]
        %v244 = vld [vmem:[#allocation2] sm:$0xff]
        %v245 = vld [vmem:[#allocation2 + $0x8] sm:$0xff]
        %v246 = vmul.f32 %v242, %v244
        %v247 = vmul.f32 %v243, %v245
        %s248 = scalar_lea.vmem [#allocation2], 160
        %v249 = vld [vmem:[%s248] sm:$0xff]
        %v250 = vld [vmem:[%s248 + $0x8] sm:$0xff]
        %v251 = vadd.f32 %v246, %v249
        %v252 = vadd.f32 %v247, %v250
        %s253 = scalar_lea.vmem [#allocation2], 320
        %v254 = vld [vmem:[%s253] sm:$0xff]
        %v255 = vld [vmem:[%s253 + $0x8] sm:$0xff]
        %v256 = vmul.f32 %v251, %v254
        %v257 = vmul.f32 %v252, %v255
        %258 = vrot.lane.b32.xlu0 %v251, 8
        %v259 = vpop.permute.xlu0 %258
        %260 = vrot.lane.b32.xlu0 %v252, 8
        %v261 = vpop.permute.xlu0 %260
        %s262 = scalar_lea.vmem [#allocation2], 336
        %v263 = vld [vmem:[%s262] sm:$0xff]
        %v264 = vld [vmem:[%s262 + $0x8] sm:$0xff]
        %v265 = vmul.f32 %v259, %v263
        %v266 = vmul.f32 %v261, %v264
        %v267 = vadd.f32 %v256, %v265
        %v268 = vadd.f32 %v257, %v266
        %269 = vrot.lane.b32.xlu0 %v251, 112
        %v270 = vpop.permute.xlu0 %269
        %271 = vrot.lane.b32.xlu0 %v252, 112
        %v272 = vpop.permute.xlu0 %271
        %s273 = scalar_lea.vmem [#allocation2], 352
        %v274 = vld [vmem:[%s273] sm:$0xff]
        %v275 = vld [vmem:[%s273 + $0x8] sm:$0xff]
        %v276 = vmul.f32 %v270, %v274
        %v277 = vmul.f32 %v272, %v275
        %v278 = vadd.f32 %v267, %v276
        %v279 = vadd.f32 %v268, %v277
        %280 = vrot.lane.b32.xlu0 %v251, 16
        %v281 = vpop.permute.xlu0 %280
        %282 = vrot.lane.b32.xlu0 %v252, 16
        %v283 = vpop.permute.xlu0 %282
        %s284 = scalar_lea.vmem [#allocation2], 368
        %v285 = vld [vmem:[%s284] sm:$0xff]
        %v286 = vld [vmem:[%s284 + $0x8] sm:$0xff]
        %v287 = vmul.f32 %v281, %v285
        %v288 = vmul.f32 %v283, %v286
        %v289 = vadd.f32 %v278, %v287
        %v290 = vadd.f32 %v279, %v288
        %291 = vrot.lane.b32.xlu0 %v251, 120
        %v292 = vpop.permute.xlu0 %291
        %293 = vrot.lane.b32.xlu0 %v252, 120
        %v294 = vpop.permute.xlu0 %293
        %s295 = scalar_lea.vmem [#allocation2], 384
        %v296 = vld [vmem:[%s295] sm:$0xff]
        %v297 = vld [vmem:[%s295 + $0x8] sm:$0xff]
        %v298 = vmul.f32 %v292, %v296
        %v299 = vmul.f32 %v294, %v297
        %v300 = vadd.f32 %v289, %v298
        %v301 = vadd.f32 %v290, %v299
        %s302 = scalar_lea.vmem [#allocation2], 16
        %v303 = vld [vmem:[%s302] sm:$0xff]
        %v304 = vld [vmem:[%s302 + $0x8] sm:$0xff]
        %v305 = vmul.f32 %v300, %v303
        %v306 = vmul.f32 %v301, %v304
        %s307 = scalar_lea.vmem [#allocation2], 176
        %v308 = vld [vmem:[%s307] sm:$0xff]
        %v309 = vld [vmem:[%s307 + $0x8] sm:$0xff]
        %v310 = vadd.f32 %v305, %v308
        %v311 = vadd.f32 %v306, %v309
        %v312 = vmax.f32 %v310, 0.0
        %v313 = vmax.f32 %v311, 0.0
        %vm316 = vcmask 1040384
        %v317 = vrot.slane %v312, 7
        %v318 = vrot.slane %v313, 7
        %v319 = vsel %vm316, %v317, %v318
        %v322 = vsel %vm316, 0.0, %v317
        %vm323 = vcmask 1046528
        %v324 = vrot.slane %v312, 1
        %v325 = vrot.slane %v313, 1
        %v326 = vsel %vm323, %v324, %v325
        %v329 = vsel %vm323, %v325, 0.0
        %330 = vrot.lane.b32.xlu0 %v322, 1
        %v331 = vpop.permute.xlu0 %330
        %332 = vrot.lane.b32.xlu0 %v319, 1
        %v333 = vpop.permute.xlu0 %332
        %s334 = scalar_lea.vmem [#allocation2], 800
        %v335 = vld [vmem:[%s334] sm:$0xff]
        %v336 = vld [vmem:[%s334 + $0x8] sm:$0xff]
        %v337 = vmul.f32 %v331, %v335
        %v338 = vmul.f32 %v333, %v336
        %v339 = vadd.f32 %v337, 0.0
        %v340 = vadd.f32 %v338, 0.0
        %s341 = scalar_lea.vmem [#allocation2], 816
        %v342 = vld [vmem:[%s341] sm:$0xff]
        %v343 = vld [vmem:[%s341 + $0x8] sm:$0xff]
        %v344 = vmul.f32 %v322, %v342
        %v345 = vmul.f32 %v319, %v343
        %v346 = vadd.f32 %v339, %v344
        %v347 = vadd.f32 %v340, %v345
        %348 = vrot.lane.b32.xlu0 %v322, 127
        %v349 = vpop.permute.xlu0 %348
        %350 = vrot.lane.b32.xlu0 %v319, 127
        %v351 = vpop.permute.xlu0 %350
        %s352 = scalar_lea.vmem [#allocation2], 832
        %v353 = vld [vmem:[%s352] sm:$0xff]
        %v354 = vld [vmem:[%s352 + $0x8] sm:$0xff]
        %v355 = vmul.f32 %v349, %v353
        %v356 = vmul.f32 %v351, %v354
        %v357 = vadd.f32 %v346, %v355
        %v358 = vadd.f32 %v347, %v356
        %359 = vrot.lane.b32.xlu0 %v312, 1
        %v360 = vpop.permute.xlu0 %359
        %361 = vrot.lane.b32.xlu0 %v313, 1
        %v362 = vpop.permute.xlu0 %361
        %s363 = scalar_lea.vmem [#allocation2], 848
        %v364 = vld [vmem:[%s363] sm:$0xff]
        %v365 = vld [vmem:[%s363 + $0x8] sm:$0xff]
        %v366 = vmul.f32 %v360, %v364
        %v367 = vmul.f32 %v362, %v365
        %v368 = vadd.f32 %v357, %v366
        %v369 = vadd.f32 %v358, %v367
        %s370 = scalar_lea.vmem [#allocation2], 864
        %v371 = vld [vmem:[%s370] sm:$0xff]
        %v372 = vld [vmem:[%s370 + $0x8] sm:$0xff]
        %v373 = vmul.f32 %v312, %v371
        %v374 = vmul.f32 %v313, %v372
        %v375 = vadd.f32 %v368, %v373
        %v376 = vadd.f32 %v369, %v374
        %377 = vrot.lane.b32.xlu0 %v312, 127
        %v378 = vpop.permute.xlu0 %377
        %379 = vrot.lane.b32.xlu0 %v313, 127
        %v380 = vpop.permute.xlu0 %379
        %s381 = scalar_lea.vmem [#allocation2], 880
        %v382 = vld [vmem:[%s381] sm:$0xff]
        %v383 = vld [vmem:[%s381 + $0x8] sm:$0xff]
        %v384 = vmul.f32 %v378, %v382
        %v385 = vmul.f32 %v380, %v383
        %v386 = vadd.f32 %v375, %v384
        %v387 = vadd.f32 %v376, %v385
        %388 = vrot.lane.b32.xlu0 %v326, 1
        %v389 = vpop.permute.xlu0 %388
        %390 = vrot.lane.b32.xlu0 %v329, 1
        %v391 = vpop.permute.xlu0 %390
        %s392 = scalar_lea.vmem [#allocation2], 896
        %v393 = vld [vmem:[%s392] sm:$0xff]
        %v394 = vld [vmem:[%s392 + $0x8] sm:$0xff]
        %v395 = vmul.f32 %v389, %v393
        %v396 = vmul.f32 %v391, %v394
        %v397 = vadd.f32 %v386, %v395
        %v398 = vadd.f32 %v387, %v396
        %s399 = scalar_lea.vmem [#allocation2], 912
        %v400 = vld [vmem:[%s399] sm:$0xff]
        %v401 = vld [vmem:[%s399 + $0x8] sm:$0xff]
        %v402 = vmul.f32 %v326, %v400
        %v403 = vmul.f32 %v329, %v401
        %v404 = vadd.f32 %v397, %v402
        %v405 = vadd.f32 %v398, %v403
        %406 = vrot.lane.b32.xlu0 %v326, 127
        %v407 = vpop.permute.xlu0 %406
        %408 = vrot.lane.b32.xlu0 %v329, 127
        %v409 = vpop.permute.xlu0 %408
        %s410 = scalar_lea.vmem [#allocation2], 928
        %v411 = vld [vmem:[%s410] sm:$0xff]
        %v412 = vld [vmem:[%s410 + $0x8] sm:$0xff]
        %v413 = vmul.f32 %v407, %v411
        %v414 = vmul.f32 %v409, %v412
        %v415 = vadd.f32 %v404, %v413
        %v416 = vadd.f32 %v405, %v414
        %s417 = scalar_lea.vmem [#allocation2], 32
        %v418 = vld [vmem:[%s417] sm:$0xff]
        %v419 = vld [vmem:[%s417 + $0x8] sm:$0xff]
        %v420 = vmul.f32 %v415, %v418
        %v421 = vmul.f32 %v416, %v419
        %s422 = scalar_lea.vmem [#allocation2], 192
        %v423 = vld [vmem:[%s422] sm:$0xff]
        %v424 = vld [vmem:[%s422 + $0x8] sm:$0xff]
        %v425 = vadd.f32 %v420, %v423
        %v426 = vadd.f32 %v421, %v424
        %v427 = vmax.f32 %v425, 0.0
        %v428 = vmax.f32 %v426, 0.0
        %s429 = scalar_lea.vmem [#allocation2], 400
        %v430 = vld [vmem:[%s429] sm:$0xff]
        %v431 = vld [vmem:[%s429 + $0x8] sm:$0xff]
        %v432 = vmul.f32 %v427, %v430
        %v433 = vmul.f32 %v428, %v431
        %434 = vrot.lane.b32.xlu0 %v427, 8
        %v435 = vpop.permute.xlu0 %434
        %436 = vrot.lane.b32.xlu0 %v428, 8
        %v437 = vpop.permute.xlu0 %436
        %s438 = scalar_lea.vmem [#allocation2], 416
        %v439 = vld [vmem:[%s438] sm:$0xff]
        %v440 = vld [vmem:[%s438 + $0x8] sm:$0xff]
        %v441 = vmul.f32 %v435, %v439
        %v442 = vmul.f32 %v437, %v440
        %v443 = vadd.f32 %v432, %v441
        %v444 = vadd.f32 %v433, %v442
        %445 = vrot.lane.b32.xlu0 %v427, 112
        %v446 = vpop.permute.xlu0 %445
        %447 = vrot.lane.b32.xlu0 %v428, 112
        %v448 = vpop.permute.xlu0 %447
        %s449 = scalar_lea.vmem [#allocation2], 432
        %v450 = vld [vmem:[%s449] sm:$0xff]
        %v451 = vld [vmem:[%s449 + $0x8] sm:$0xff]
        %v452 = vmul.f32 %v446, %v450
        %v453 = vmul.f32 %v448, %v451
        %v454 = vadd.f32 %v443, %v452
        %v455 = vadd.f32 %v444, %v453
        %456 = vrot.lane.b32.xlu0 %v427, 16
        %v457 = vpop.permute.xlu0 %456
        %458 = vrot.lane.b32.xlu0 %v428, 16
        %v459 = vpop.permute.xlu0 %458
        %s460 = scalar_lea.vmem [#allocation2], 448
        %v461 = vld [vmem:[%s460] sm:$0xff]
        %v462 = vld [vmem:[%s460 + $0x8] sm:$0xff]
        %v463 = vmul.f32 %v457, %v461
        %v464 = vmul.f32 %v459, %v462
        %v465 = vadd.f32 %v454, %v463
        %v466 = vadd.f32 %v455, %v464
        %467 = vrot.lane.b32.xlu0 %v427, 120
        %v468 = vpop.permute.xlu0 %467
        %469 = vrot.lane.b32.xlu0 %v428, 120
        %v470 = vpop.permute.xlu0 %469
        %s471 = scalar_lea.vmem [#allocation2], 464
        %v472 = vld [vmem:[%s471] sm:$0xff]
        %v473 = vld [vmem:[%s471 + $0x8] sm:$0xff]
        %v474 = vmul.f32 %v468, %v472
        %v475 = vmul.f32 %v470, %v473
        %v476 = vadd.f32 %v465, %v474
        %v477 = vadd.f32 %v466, %v475
        %s478 = scalar_lea.vmem [#allocation2], 48
        %v479 = vld [vmem:[%s478] sm:$0xff]
        %v480 = vld [vmem:[%s478 + $0x8] sm:$0xff]
        %v481 = vmul.f32 %v476, %v479
        %v482 = vmul.f32 %v477, %v480
        %s483 = scalar_lea.vmem [#allocation2], 208
        %v484 = vld [vmem:[%s483] sm:$0xff]
        %v485 = vld [vmem:[%s483 + $0x8] sm:$0xff]
        %v486 = vadd.f32 %v481, %v484
        %v487 = vadd.f32 %v482, %v485
        %v488 = vadd.f32 %v486, %v251
        %v489 = vadd.f32 %v487, %v252
        %v490 = vmax.f32 %v488, 0.0
        %v491 = vmax.f32 %v489, 0.0
        %s492 = scalar_lea.vmem [#allocation2], 480
        %v493 = vld [vmem:[%s492] sm:$0xff]
        %v494 = vld [vmem:[%s492 + $0x8] sm:$0xff]
        %v495 = vmul.f32 %v490, %v493
        %v496 = vmul.f32 %v491, %v494
        %497 = vrot.lane.b32.xlu0 %v490, 8
        %v498 = vpop.permute.xlu0 %497
        %499 = vrot.lane.b32.xlu0 %v491, 8
        %v500 = vpop.permute.xlu0 %499
        %s501 = scalar_lea.vmem [#allocation2], 496
        %v502 = vld [vmem:[%s501] sm:$0xff]
        %v503 = vld [vmem:[%s501 + $0x8] sm:$0xff]
        %v504 = vmul.f32 %v498, %v502
        %v505 = vmul.f32 %v500, %v503
        %v506 = vadd.f32 %v495, %v504
        %v507 = vadd.f32 %v496, %v505
        %508 = vrot.lane.b32.xlu0 %v490, 112
        %v509 = vpop.permute.xlu0 %508
        %510 = vrot.lane.b32.xlu0 %v491, 112
        %v511 = vpop.permute.xlu0 %510
        %s512 = scalar_lea.vmem [#allocation2], 512
        %v513 = vld [vmem:[%s512] sm:$0xff]
        %v514 = vld [vmem:[%s512 + $0x8] sm:$0xff]
        %v515 = vmul.f32 %v509, %v513
        %v516 = vmul.f32 %v511, %v514
        %v517 = vadd.f32 %v506, %v515
        %v518 = vadd.f32 %v507, %v516
        %519 = vrot.lane.b32.xlu0 %v490, 16
        %v520 = vpop.permute.xlu0 %519
        %521 = vrot.lane.b32.xlu0 %v491, 16
        %v522 = vpop.permute.xlu0 %521
        %s523 = scalar_lea.vmem [#allocation2], 528
        %v524 = vld [vmem:[%s523] sm:$0xff]
        %v525 = vld [vmem:[%s523 + $0x8] sm:$0xff]
        %v526 = vmul.f32 %v520, %v524
        %v527 = vmul.f32 %v522, %v525
        %v528 = vadd.f32 %v517, %v526
        %v529 = vadd.f32 %v518, %v527
        %530 = vrot.lane.b32.xlu0 %v490, 120
        %v531 = vpop.permute.xlu0 %530
        %532 = vrot.lane.b32.xlu0 %v491, 120
        %v533 = vpop.permute.xlu0 %532
        %s534 = scalar_lea.vmem [#allocation2], 544
        %v535 = vld [vmem:[%s534] sm:$0xff]
        %v536 = vld [vmem:[%s534 + $0x8] sm:$0xff]
        %v537 = vmul.f32 %v531, %v535
        %v538 = vmul.f32 %v533, %v536
        %v539 = vadd.f32 %v528, %v537
        %v540 = vadd.f32 %v529, %v538
        %s541 = scalar_lea.vmem [#allocation2], 64
        %v542 = vld [vmem:[%s541] sm:$0xff]
        %v543 = vld [vmem:[%s541 + $0x8] sm:$0xff]
        %v544 = vmul.f32 %v539, %v542
        %v545 = vmul.f32 %v540, %v543
        %s546 = scalar_lea.vmem [#allocation2], 224
        %v547 = vld [vmem:[%s546] sm:$0xff]
        %v548 = vld [vmem:[%s546 + $0x8] sm:$0xff]
        %v549 = vadd.f32 %v544, %v547
        %v550 = vadd.f32 %v545, %v548
        %v551 = vmax.f32 %v549, 0.0
        %v552 = vmax.f32 %v550, 0.0
        %v555 = vrot.slane %v551, 7
        %v556 = vrot.slane %v552, 7
        %v557 = vsel %vm316, %v555, %v556
        %v560 = vsel %vm316, 0.0, %v555
        %v561 = vrot.slane %v551, 1
        %v562 = vrot.slane %v552, 1
        %v563 = vsel %vm323, %v561, %v562
        %v566 = vsel %vm323, %v562, 0.0
        %567 = vrot.lane.b32.xlu0 %v560, 1
        %v568 = vpop.permute.xlu0 %567
        %569 = vrot.lane.b32.xlu0 %v557, 1
        %v570 = vpop.permute.xlu0 %569
        %s571 = scalar_lea.vmem [#allocation2], 944
        %v572 = vld [vmem:[%s571] sm:$0xff]
        %v573 = vld [vmem:[%s571 + $0x8] sm:$0xff]
        %v574 = vmul.f32 %v568, %v572
        %v575 = vmul.f32 %v570, %v573
        %v576 = vadd.f32 %v574, 0.0
        %v577 = vadd.f32 %v575, 0.0
        %s578 = scalar_lea.vmem [#allocation2], 960
        %v579 = vld [vmem:[%s578] sm:$0xff]
        %v580 = vld [vmem:[%s578 + $0x8] sm:$0xff]
        %v581 = vmul.f32 %v560, %v579
        %v582 = vmul.f32 %v557, %v580
        %v583 = vadd.f32 %v576, %v581
        %v584 = vadd.f32 %v577, %v582
        %585 = vrot.lane.b32.xlu0 %v560, 127
        %v586 = vpop.permute.xlu0 %585
        %587 = vrot.lane.b32.xlu0 %v557, 127
        %v588 = vpop.permute.xlu0 %587
        %s589 = scalar_lea.vmem [#allocation2], 976
        %v590 = vld [vmem:[%s589] sm:$0xff]
        %v591 = vld [vmem:[%s589 + $0x8] sm:$0xff]
        %v592 = vmul.f32 %v586, %v590
        %v593 = vmul.f32 %v588, %v591
        %v594 = vadd.f32 %v583, %v592
        %v595 = vadd.f32 %v584, %v593
        %596 = vrot.lane.b32.xlu0 %v551, 1
        %v597 = vpop.permute.xlu0 %596
        %598 = vrot.lane.b32.xlu0 %v552, 1
        %v599 = vpop.permute.xlu0 %598
        %s600 = scalar_lea.vmem [#allocation2], 992
        %v601 = vld [vmem:[%s600] sm:$0xff]
        %v602 = vld [vmem:[%s600 + $0x8] sm:$0xff]
        %v603 = vmul.f32 %v597, %v601
        %v604 = vmul.f32 %v599, %v602
        %v605 = vadd.f32 %v594, %v603
        %v606 = vadd.f32 %v595, %v604
        %s607 = scalar_lea.vmem [#allocation2], 1008
        %v608 = vld [vmem:[%s607] sm:$0xff]
        %v609 = vld [vmem:[%s607 + $0x8] sm:$0xff]
        %v610 = vmul.f32 %v551, %v608
        %v611 = vmul.f32 %v552, %v609
        %v612 = vadd.f32 %v605, %v610
        %v613 = vadd.f32 %v606, %v611
        %614 = vrot.lane.b32.xlu0 %v551, 127
        %v615 = vpop.permute.xlu0 %614
        %616 = vrot.lane.b32.xlu0 %v552, 127
        %v617 = vpop.permute.xlu0 %616
        %s618 = scalar_lea.vmem [#allocation2], 1024
        %v619 = vld [vmem:[%s618] sm:$0xff]
        %v620 = vld [vmem:[%s618 + $0x8] sm:$0xff]
        %v621 = vmul.f32 %v615, %v619
        %v622 = vmul.f32 %v617, %v620
        %v623 = vadd.f32 %v612, %v621
        %v624 = vadd.f32 %v613, %v622
        %625 = vrot.lane.b32.xlu0 %v563, 1
        %v626 = vpop.permute.xlu0 %625
        %627 = vrot.lane.b32.xlu0 %v566, 1
        %v628 = vpop.permute.xlu0 %627
        %s629 = scalar_lea.vmem [#allocation2], 1040
        %v630 = vld [vmem:[%s629] sm:$0xff]
        %v631 = vld [vmem:[%s629 + $0x8] sm:$0xff]
        %v632 = vmul.f32 %v626, %v630
        %v633 = vmul.f32 %v628, %v631
        %v634 = vadd.f32 %v623, %v632
        %v635 = vadd.f32 %v624, %v633
        %s636 = scalar_lea.vmem [#allocation2], 1056
        %v637 = vld [vmem:[%s636] sm:$0xff]
        %v638 = vld [vmem:[%s636 + $0x8] sm:$0xff]
        %v639 = vmul.f32 %v563, %v637
        %v640 = vmul.f32 %v566, %v638
        %v641 = vadd.f32 %v634, %v639
        %v642 = vadd.f32 %v635, %v640
        %643 = vrot.lane.b32.xlu0 %v563, 127
        %v644 = vpop.permute.xlu0 %643
        %645 = vrot.lane.b32.xlu0 %v566, 127
        %v646 = vpop.permute.xlu0 %645
        %s647 = scalar_lea.vmem [#allocation2], 1072
        %v648 = vld [vmem:[%s647] sm:$0xff]
        %v649 = vld [vmem:[%s647 + $0x8] sm:$0xff]
        %v650 = vmul.f32 %v644, %v648
        %v651 = vmul.f32 %v646, %v649
        %v652 = vadd.f32 %v641, %v650
        %v653 = vadd.f32 %v642, %v651
        %s654 = scalar_lea.vmem [#allocation2], 80
        %v655 = vld [vmem:[%s654] sm:$0xff]
        %v656 = vld [vmem:[%s654 + $0x8] sm:$0xff]
        %v657 = vmul.f32 %v652, %v655
        %v658 = vmul.f32 %v653, %v656
        %s659 = scalar_lea.vmem [#allocation2], 240
        %v660 = vld [vmem:[%s659] sm:$0xff]
        %v661 = vld [vmem:[%s659 + $0x8] sm:$0xff]
        %v662 = vadd.f32 %v657, %v660
        %v663 = vadd.f32 %v658, %v661
        %v664 = vmax.f32 %v662, 0.0
        %v665 = vmax.f32 %v663, 0.0
        %s666 = scalar_lea.vmem [#allocation2], 560
        %v667 = vld [vmem:[%s666] sm:$0xff]
        %v668 = vld [vmem:[%s666 + $0x8] sm:$0xff]
        %v669 = vmul.f32 %v664, %v667
        %v670 = vmul.f32 %v665, %v668
        %671 = vrot.lane.b32.xlu0 %v664, 8
        %v672 = vpop.permute.xlu0 %671
        %673 = vrot.lane.b32.xlu0 %v665, 8
        %v674 = vpop.permute.xlu0 %673
        %s675 = scalar_lea.vmem [#allocation2], 576
        %v676 = vld [vmem:[%s675] sm:$0xff]
        %v677 = vld [vmem:[%s675 + $0x8] sm:$0xff]
        %v678 = vmul.f32 %v672, %v676
        %v679 = vmul.f32 %v674, %v677
        %v680 = vadd.f32 %v669, %v678
        %v681 = vadd.f32 %v670, %v679
        %682 = vrot.lane.b32.xlu0 %v664, 112
        %v683 = vpop.permute.xlu0 %682
        %684 = vrot.lane.b32.xlu0 %v665, 112
        %v685 = vpop.permute.xlu0 %684
        %s686 = scalar_lea.vmem [#allocation2], 592
        %v687 = vld [vmem:[%s686] sm:$0xff]
        %v688 = vld [vmem:[%s686 + $0x8] sm:$0xff]
        %v689 = vmul.f32 %v683, %v687
        %v690 = vmul.f32 %v685, %v688
        %v691 = vadd.f32 %v680, %v689
        %v692 = vadd.f32 %v681, %v690
        %693 = vrot.lane.b32.xlu0 %v664, 16
        %v694 = vpop.permute.xlu0 %693
        %695 = vrot.lane.b32.xlu0 %v665, 16
        %v696 = vpop.permute.xlu0 %695
        %s697 = scalar_lea.vmem [#allocation2], 608
        %v698 = vld [vmem:[%s697] sm:$0xff]
        %v699 = vld [vmem:[%s697 + $0x8] sm:$0xff]
        %v700 = vmul.f32 %v694, %v698
        %v701 = vmul.f32 %v696, %v699
        %v702 = vadd.f32 %v691, %v700
        %v703 = vadd.f32 %v692, %v701
        %704 = vrot.lane.b32.xlu0 %v664, 120
        %v705 = vpop.permute.xlu0 %704
        %706 = vrot.lane.b32.xlu0 %v665, 120
        %v707 = vpop.permute.xlu0 %706
        %s708 = scalar_lea.vmem [#allocation2], 624
        %v709 = vld [vmem:[%s708] sm:$0xff]
        %v710 = vld [vmem:[%s708 + $0x8] sm:$0xff]
        %v711 = vmul.f32 %v705, %v709
        %v712 = vmul.f32 %v707, %v710
        %v713 = vadd.f32 %v702, %v711
        %v714 = vadd.f32 %v703, %v712
        %s715 = scalar_lea.vmem [#allocation2], 96
        %v716 = vld [vmem:[%s715] sm:$0xff]
        %v717 = vld [vmem:[%s715 + $0x8] sm:$0xff]
        %v718 = vmul.f32 %v713, %v716
        %v719 = vmul.f32 %v714, %v717
        %s720 = scalar_lea.vmem [#allocation2], 256
        %v721 = vld [vmem:[%s720] sm:$0xff]
        %v722 = vld [vmem:[%s720 + $0x8] sm:$0xff]
        %v723 = vadd.f32 %v718, %v721
        %v724 = vadd.f32 %v719, %v722
        %v725 = vadd.f32 %v723, %v490
        %v726 = vadd.f32 %v724, %v491
        %v727 = vmax.f32 %v725, 0.0
        %v728 = vmax.f32 %v726, 0.0
        %s729 = scalar_lea.vmem [#allocation2], 640
        %v730 = vld [vmem:[%s729] sm:$0xff]
        %v731 = vld [vmem:[%s729 + $0x8] sm:$0xff]
        %v732 = vmul.f32 %v727, %v730
        %v733 = vmul.f32 %v728, %v731
        %734 = vrot.lane.b32.xlu0 %v727, 8
        %v735 = vpop.permute.xlu0 %734
        %736 = vrot.lane.b32.xlu0 %v728, 8
        %v737 = vpop.permute.xlu0 %736
        %s738 = scalar_lea.vmem [#allocation2], 656
        %v739 = vld [vmem:[%s738] sm:$0xff]
        %v740 = vld [vmem:[%s738 + $0x8] sm:$0xff]
        %v741 = vmul.f32 %v735, %v739
        %v742 = vmul.f32 %v737, %v740
        %v743 = vadd.f32 %v732, %v741
        %v744 = vadd.f32 %v733, %v742
        %745 = vrot.lane.b32.xlu0 %v727, 112
        %v746 = vpop.permute.xlu0 %745
        %747 = vrot.lane.b32.xlu0 %v728, 112
        %v748 = vpop.permute.xlu0 %747
        %s749 = scalar_lea.vmem [#allocation2], 672
        %v750 = vld [vmem:[%s749] sm:$0xff]
        %v751 = vld [vmem:[%s749 + $0x8] sm:$0xff]
        %v752 = vmul.f32 %v746, %v750
        %v753 = vmul.f32 %v748, %v751
        %v754 = vadd.f32 %v743, %v752
        %v755 = vadd.f32 %v744, %v753
        %756 = vrot.lane.b32.xlu0 %v727, 16
        %v757 = vpop.permute.xlu0 %756
        %758 = vrot.lane.b32.xlu0 %v728, 16
        %v759 = vpop.permute.xlu0 %758
        %s760 = scalar_lea.vmem [#allocation2], 688
        %v761 = vld [vmem:[%s760] sm:$0xff]
        %v762 = vld [vmem:[%s760 + $0x8] sm:$0xff]
        %v763 = vmul.f32 %v757, %v761
        %v764 = vmul.f32 %v759, %v762
        %v765 = vadd.f32 %v754, %v763
        %v766 = vadd.f32 %v755, %v764
        %767 = vrot.lane.b32.xlu0 %v727, 120
        %v768 = vpop.permute.xlu0 %767
        %769 = vrot.lane.b32.xlu0 %v728, 120
        %v770 = vpop.permute.xlu0 %769
        %s771 = scalar_lea.vmem [#allocation2], 704
        %v772 = vld [vmem:[%s771] sm:$0xff]
        %v773 = vld [vmem:[%s771 + $0x8] sm:$0xff]
        %v774 = vmul.f32 %v768, %v772
        %v775 = vmul.f32 %v770, %v773
        %v776 = vadd.f32 %v765, %v774
        %v777 = vadd.f32 %v766, %v775
        %s778 = scalar_lea.vmem [#allocation2], 112
        %v779 = vld [vmem:[%s778] sm:$0xff]
        %v780 = vld [vmem:[%s778 + $0x8] sm:$0xff]
        %v781 = vmul.f32 %v776, %v779
        %v782 = vmul.f32 %v777, %v780
        %s783 = scalar_lea.vmem [#allocation2], 272
        %v784 = vld [vmem:[%s783] sm:$0xff]
        %v785 = vld [vmem:[%s783 + $0x8] sm:$0xff]
        %v786 = vadd.f32 %v781, %v784
        %v787 = vadd.f32 %v782, %v785
        %v788 = vmax.f32 %v786, 0.0
        %v789 = vmax.f32 %v787, 0.0
        %v792 = vrot.slane %v788, 7
        %v793 = vrot.slane %v789, 7
        %v794 = vsel %vm316, %v792, %v793
        %v797 = vsel %vm316, 0.0, %v792
        %v798 = vrot.slane %v788, 1
        %v799 = vrot.slane %v789, 1
        %v800 = vsel %vm323, %v798, %v799
        %v803 = vsel %vm323, %v799, 0.0
        %804 = vrot.lane.b32.xlu0 %v797, 1
        %v805 = vpop.permute.xlu0 %804
        %806 = vrot.lane.b32.xlu0 %v794, 1
        %v807 = vpop.permute.xlu0 %806
        %s808 = scalar_lea.vmem [#allocation2], 1088
        %v809 = vld [vmem:[%s808] sm:$0xff]
        %v810 = vld [vmem:[%s808 + $0x8] sm:$0xff]
        %v811 = vmul.f32 %v805, %v809
        %v812 = vmul.f32 %v807, %v810
        %v813 = vadd.f32 %v811, 0.0
        %v814 = vadd.f32 %v812, 0.0
        %s815 = scalar_lea.vmem [#allocation2], 1104
        %v816 = vld [vmem:[%s815] sm:$0xff]
        %v817 = vld [vmem:[%s815 + $0x8] sm:$0xff]
        %v818 = vmul.f32 %v797, %v816
        %v819 = vmul.f32 %v794, %v817
        %v820 = vadd.f32 %v813, %v818
        %v821 = vadd.f32 %v814, %v819
        %822 = vrot.lane.b32.xlu0 %v797, 127
        %v823 = vpop.permute.xlu0 %822
        %824 = vrot.lane.b32.xlu0 %v794, 127
        %v825 = vpop.permute.xlu0 %824
        %s826 = scalar_lea.vmem [#allocation2], 1120
        %v827 = vld [vmem:[%s826] sm:$0xff]
        %v828 = vld [vmem:[%s826 + $0x8] sm:$0xff]
        %v829 = vmul.f32 %v823, %v827
        %v830 = vmul.f32 %v825, %v828
        %v831 = vadd.f32 %v820, %v829
        %v832 = vadd.f32 %v821, %v830
        %833 = vrot.lane.b32.xlu0 %v788, 1
        %v834 = vpop.permute.xlu0 %833
        %835 = vrot.lane.b32.xlu0 %v789, 1
        %v836 = vpop.permute.xlu0 %835
        %s837 = scalar_lea.vmem [#allocation2], 1136
        %v838 = vld [vmem:[%s837] sm:$0xff]
        %v839 = vld [vmem:[%s837 + $0x8] sm:$0xff]
        %v840 = vmul.f32 %v834, %v838
        %v841 = vmul.f32 %v836, %v839
        %v842 = vadd.f32 %v831, %v840
        %v843 = vadd.f32 %v832, %v841
        %s844 = scalar_lea.vmem [#allocation2], 1152
        %v845 = vld [vmem:[%s844] sm:$0xff]
        %v846 = vld [vmem:[%s844 + $0x8] sm:$0xff]
        %v847 = vmul.f32 %v788, %v845
        %v848 = vmul.f32 %v789, %v846
        %v849 = vadd.f32 %v842, %v847
        %v850 = vadd.f32 %v843, %v848
        %851 = vrot.lane.b32.xlu0 %v788, 127
        %v852 = vpop.permute.xlu0 %851
        %853 = vrot.lane.b32.xlu0 %v789, 127
        %v854 = vpop.permute.xlu0 %853
        %s855 = scalar_lea.vmem [#allocation2], 1168
        %v856 = vld [vmem:[%s855] sm:$0xff]
        %v857 = vld [vmem:[%s855 + $0x8] sm:$0xff]
        %v858 = vmul.f32 %v852, %v856
        %v859 = vmul.f32 %v854, %v857
        %v860 = vadd.f32 %v849, %v858
        %v861 = vadd.f32 %v850, %v859
        %862 = vrot.lane.b32.xlu0 %v800, 1
        %v863 = vpop.permute.xlu0 %862
        %864 = vrot.lane.b32.xlu0 %v803, 1
        %v865 = vpop.permute.xlu0 %864
        %s866 = scalar_lea.vmem [#allocation2], 1184
        %v867 = vld [vmem:[%s866] sm:$0xff]
        %v868 = vld [vmem:[%s866 + $0x8] sm:$0xff]
        %v869 = vmul.f32 %v863, %v867
        %v870 = vmul.f32 %v865, %v868
        %v871 = vadd.f32 %v860, %v869
        %v872 = vadd.f32 %v861, %v870
        %s873 = scalar_lea.vmem [#allocation2], 1200
        %v874 = vld [vmem:[%s873] sm:$0xff]
        %v875 = vld [vmem:[%s873 + $0x8] sm:$0xff]
        %v876 = vmul.f32 %v800, %v874
        %v877 = vmul.f32 %v803, %v875
        %v878 = vadd.f32 %v871, %v876
        %v879 = vadd.f32 %v872, %v877
        %880 = vrot.lane.b32.xlu0 %v800, 127
        %v881 = vpop.permute.xlu0 %880
        %882 = vrot.lane.b32.xlu0 %v803, 127
        %v883 = vpop.permute.xlu0 %882
        %s884 = scalar_lea.vmem [#allocation2], 1216
        %v885 = vld [vmem:[%s884] sm:$0xff]
        %v886 = vld [vmem:[%s884 + $0x8] sm:$0xff]
        %v887 = vmul.f32 %v881, %v885
        %v888 = vmul.f32 %v883, %v886
        %v889 = vadd.f32 %v878, %v887
        %v890 = vadd.f32 %v879, %v888
        %s891 = scalar_lea.vmem [#allocation2], 128
        %v892 = vld [vmem:[%s891] sm:$0xff]
        %v893 = vld [vmem:[%s891 + $0x8] sm:$0xff]
        %v894 = vmul.f32 %v889, %v892
        %v895 = vmul.f32 %v890, %v893
        %s896 = scalar_lea.vmem [#allocation2], 288
        %v897 = vld [vmem:[%s896] sm:$0xff]
        %v898 = vld [vmem:[%s896 + $0x8] sm:$0xff]
        %v899 = vadd.f32 %v894, %v897
        %v900 = vadd.f32 %v895, %v898
        %v901 = vmax.f32 %v899, 0.0
        %v902 = vmax.f32 %v900, 0.0
        %s903 = scalar_lea.vmem [#allocation2], 720
        %v904 = vld [vmem:[%s903] sm:$0xff]
        %v905 = vld [vmem:[%s903 + $0x8] sm:$0xff]
        %v906 = vmul.f32 %v901, %v904
        %v907 = vmul.f32 %v902, %v905
        %908 = vrot.lane.b32.xlu0 %v901, 8
        %v909 = vpop.permute.xlu0 %908
        %910 = vrot.lane.b32.xlu0 %v902, 8
        %v911 = vpop.permute.xlu0 %910
        %s912 = scalar_lea.vmem [#allocation2], 736
        %v913 = vld [vmem:[%s912] sm:$0xff]
        %v914 = vld [vmem:[%s912 + $0x8] sm:$0xff]
        %v915 = vmul.f32 %v909, %v913
        %v916 = vmul.f32 %v911, %v914
        %v917 = vadd.f32 %v906, %v915
        %v918 = vadd.f32 %v907, %v916
        %919 = vrot.lane.b32.xlu0 %v901, 112
        %v920 = vpop.permute.xlu0 %919
        %921 = vrot.lane.b32.xlu0 %v902, 112
        %v922 = vpop.permute.xlu0 %921
        %s923 = scalar_lea.vmem [#allocation2], 752
        %v924 = vld [vmem:[%s923] sm:$0xff]
        %v925 = vld [vmem:[%s923 + $0x8] sm:$0xff]
        %v926 = vmul.f32 %v920, %v924
        %v927 = vmul.f32 %v922, %v925
        %v928 = vadd.f32 %v917, %v926
        %v929 = vadd.f32 %v918, %v927
        %930 = vrot.lane.b32.xlu0 %v901, 16
        %v931 = vpop.permute.xlu0 %930
        %932 = vrot.lane.b32.xlu0 %v902, 16
        %v933 = vpop.permute.xlu0 %932
        %s934 = scalar_lea.vmem [#allocation2], 768
        %v935 = vld [vmem:[%s934] sm:$0xff]
        %v936 = vld [vmem:[%s934 + $0x8] sm:$0xff]
        %v937 = vmul.f32 %v931, %v935
        %v938 = vmul.f32 %v933, %v936
        %v939 = vadd.f32 %v928, %v937
        %v940 = vadd.f32 %v929, %v938
        %941 = vrot.lane.b32.xlu0 %v901, 120
        %v942 = vpop.permute.xlu0 %941
        %943 = vrot.lane.b32.xlu0 %v902, 120
        %v944 = vpop.permute.xlu0 %943
        %s945 = scalar_lea.vmem [#allocation2], 784
        %v946 = vld [vmem:[%s945] sm:$0xff]
        %v947 = vld [vmem:[%s945 + $0x8] sm:$0xff]
        %v948 = vmul.f32 %v942, %v946
        %v949 = vmul.f32 %v944, %v947
        %v950 = vadd.f32 %v939, %v948
        %v951 = vadd.f32 %v940, %v949
        %s952 = scalar_lea.vmem [#allocation2], 144
        %v953 = vld [vmem:[%s952] sm:$0xff]
        %v954 = vld [vmem:[%s952 + $0x8] sm:$0xff]
        %v955 = vmul.f32 %v950, %v953
        %v956 = vmul.f32 %v951, %v954
        %s957 = scalar_lea.vmem [#allocation2], 304
        %v958 = vld [vmem:[%s957] sm:$0xff]
        %v959 = vld [vmem:[%s957 + $0x8] sm:$0xff]
        %v960 = vadd.f32 %v955, %v958
        %v961 = vadd.f32 %v956, %v959
        %v962 = vadd.f32 %v960, %v727
        %v963 = vadd.f32 %v961, %v728
        %v964 = vmax.f32 %v962, 0.0
        %v965 = vmax.f32 %v963, 0.0
        %v968 = vrot.slane %v964, 7
        %v969 = vrot.slane %v965, 7
        %v970 = vsel %vm316, %v968, %v969
        %v973 = vsel %vm316, 0.0, %v968
        %v974 = vrot.slane %v964, 1
        %v975 = vrot.slane %v965, 1
        %v976 = vsel %vm323, %v974, %v975
        %v979 = vsel %vm323, %v975, 0.0
        %v980 = vld [vmem:[%s2] sm:$0xff]
        %v981 = vld [vmem:[%s2 + $0x8] sm:$0xff]
        %v982 = vld [vmem:[%s2 + $0x10] sm:$0xff]
        %v983 = vld [vmem:[%s2 + $0x18] sm:$0x7f]
        %v984 = vld [vmem:[%s2 + $0x20] sm:$0x7f]
        %v985 = vld [vmem:[%s2 + $0x28] sm:$0x7f]
        %986 = vmatpush.xpose.msra.mxu0 0.0
        %987 = vmatpush.xpose.msra.mxu0 0.0
        %988 = vmatpush.xpose.msra.mxu0 0.0
        %989 = vmatpush.xpose.msra.mxu0 0.0
        %990 = vmatpush.xpose.msra.mxu0 0.0
        %991 = vmatpush.xpose.msra.mxu0 0.0
        %992 = vmatpush.xpose.msra.mxu0 0.0
        %993 = vmatpush.xpose.msra.mxu0 0.0
        %994 = vmatpush.xpose.msra.mxu0 0.0
        %995 = vmatpush.xpose.msra.mxu0 0.0
        %996 = vmatpush.xpose.msra.mxu0 0.0
        %997 = vmatpush.xpose.msra.mxu0 0.0
        %998 = vmatpush.xpose.msra.mxu0 0.0
        %999 = vmatpush.xpose.msra.mxu0 0.0
        %1000 = vmatpush.xpose.msra.mxu0 %v970
        %1001 = vmatpush.xpose.msra.mxu0 %v973
        %1002 = vmatmul.f32.gmra.mxu0 %v980
        %v1003 = vpop.f32.mrf.mxu0
        %v1004 = vadd.f32 0.0, %v1003
        %1005 = vmatmul.f32.gmra.mxu0 %v983
        %v1006 = vpop.f32.mrf.mxu0
        %v1007 = vadd.f32 0.0, %v1006
        %1008 = vdwg.mxu0
        %1009 = vmatpush.xpose.msra.mxu0 0.0
        %1010 = vmatpush.xpose.msra.mxu0 0.0
        %1011 = vmatpush.xpose.msra.mxu0 0.0
        %1012 = vmatpush.xpose.msra.mxu0 0.0
        %1013 = vmatpush.xpose.msra.mxu0 0.0
        %1014 = vmatpush.xpose.msra.mxu0 0.0
        %1015 = vmatpush.xpose.msra.mxu0 0.0
        %1016 = vmatpush.xpose.msra.mxu0 0.0
        %1017 = vmatpush.xpose.msra.mxu0 0.0
        %1018 = vmatpush.xpose.msra.mxu0 0.0
        %1019 = vmatpush.xpose.msra.mxu0 0.0
        %1020 = vmatpush.xpose.msra.mxu0 0.0
        %1021 = vmatpush.xpose.msra.mxu0 0.0
        %1022 = vmatpush.xpose.msra.mxu0 0.0
        %1023 = vmatpush.xpose.msra.mxu0 %v965
        %1024 = vmatpush.xpose.msra.mxu0 %v964
        %1025 = vmatmul.f32.gmra.mxu0 %v981
        %v1026 = vpop.f32.mrf.mxu0
        %v1027 = vadd.f32 %v1004, %v1026
        %1028 = vmatmul.f32.gmra.mxu0 %v984
        %v1029 = vpop.f32.mrf.mxu0
        %v1030 = vadd.f32 %v1007, %v1029
        %1031 = vdwg.mxu0
        %1032 = vmatpush.xpose.msra.mxu0 0.0
        %1033 = vmatpush.xpose.msra.mxu0 0.0
        %1034 = vmatpush.xpose.msra.mxu0 0.0
        %1035 = vmatpush.xpose.msra.mxu0 0.0
        %1036 = vmatpush.xpose.msra.mxu0 0.0
        %1037 = vmatpush.xpose.msra.mxu0 0.0
        %1038 = vmatpush.xpose.msra.mxu0 0.0
        %1039 = vmatpush.xpose.msra.mxu0 0.0
        %1040 = vmatpush.xpose.msra.mxu0 0.0
        %1041 = vmatpush.xpose.msra.mxu0 0.0
        %1042 = vmatpush.xpose.msra.mxu0 0.0
        %1043 = vmatpush.xpose.msra.mxu0 0.0
        %1044 = vmatpush.xpose.msra.mxu0 0.0
        %1045 = vmatpush.xpose.msra.mxu0 0.0
        %1046 = vmatpush.xpose.msra.mxu0 %v979
        %1047 = vmatpush.xpose.msra.mxu0 %v976
        %1048 = vmatmul.f32.gmra.mxu0 %v982
        %v1049 = vpop.f32.mrf.mxu0
        %v1050 = vadd.f32 %v1027, %v1049
        %1051 = vmatmul.f32.gmra.mxu0 %v985
        %v1052 = vpop.f32.mrf.mxu0
        %v1053 = vadd.f32 %v1030, %v1052
        %1054 = vdwg.mxu0
        %v1055 = vld [vmem:[%s3] sm:$0xff]
        %v1056 = vld [vmem:[%s3 + $0x8] sm:$0xff]
        %v1057 = vld [vmem:[%s4] sm:$0xff]
        %v1058 = vld [vmem:[%s4 + $0x8] sm:$0x7f]
        %vm1059 = vcmask 130048
        %v1061 = vsel %vm1059, %v1050, 0
        %v1064 = vsel %vm1059, %v1053, 0
        %1066 = vmatpush.msra.mxu0 0.0
        %1067 = vmatpush.msra.mxu0 0.0
        %1068 = vmatpush.msra.mxu0 0.0
        %1069 = vmatpush.msra.mxu0 0.0
        %1070 = vmatpush.msra.mxu0 0.0
        %1071 = vmatpush.msra.mxu0 0.0
        %1072 = vmatpush.msra.mxu0 0.0
        %1073 = vmatpush.msra.mxu0 0.0
        %1074 = vmatpush.msra.mxu0 0.0
        %1075 = vmatpush.msra.mxu0 0.0
        %1076 = vmatpush.msra.mxu0 0.0
        %1077 = vmatpush.msra.mxu0 0.0
        %1078 = vmatpush.msra.mxu0 0.0
        %1079 = vmatpush.msra.mxu0 0.0
        %1080 = vmatpush.msra.mxu0 %v1056
        %1081 = vmatpush.msra.mxu0 %v1055
        %1082 = vmatmul.f32.gmra.mxu0 %v1061
        %v1083 = vpop.f32.mrf.mxu0
        %v1084 = vadd.f32 %v1057, %v1083
        %1085 = vmatmul.f32.gmra.mxu0 %v1064
        %v1086 = vpop.f32.mrf.mxu0
        %v1087 = vadd.f32 %v1058, %v1086
        %1088 = vdwg.mxu0
        %v1089 = vmax.f32 %v1084, 0.0
        %v1090 = vmax.f32 %v1087, 0.0
        %s1091 = scalar_lea.vmem %s3, 16
        %v1092 = vld [vmem:[%s1091] sm:$0xff]
        %v1093 = vld [vmem:[%s1091 + $0x8] sm:$0xff]
        %s1094 = scalar_lea.vmem %s4, 16
        %v1095 = vld [vmem:[%s1094] sm:$0xff]
        %v1096 = vld [vmem:[%s1094 + $0x8] sm:$0x7f]
        %v1098 = vsel %vm1059, %v1089, 0
        %v1101 = vsel %vm1059, %v1090, 0
        %1103 = vmatpush.msra.mxu0 0.0
        %1104 = vmatpush.msra.mxu0 0.0
        %1105 = vmatpush.msra.mxu0 0.0
        %1106 = vmatpush.msra.mxu0 0.0
        %1107 = vmatpush.msra.mxu0 0.0
        %1108 = vmatpush.msra.mxu0 0.0
        %1109 = vmatpush.msra.mxu0 0.0
        %1110 = vmatpush.msra.mxu0 0.0
        %1111 = vmatpush.msra.mxu0 0.0
        %1112 = vmatpush.msra.mxu0 0.0
        %1113 = vmatpush.msra.mxu0 0.0
        %1114 = vmatpush.msra.mxu0 0.0
        %1115 = vmatpush.msra.mxu0 0.0
        %1116 = vmatpush.msra.mxu0 0.0
        %1117 = vmatpush.msra.mxu0 %v1093
        %1118 = vmatpush.msra.mxu0 %v1092
        %1119 = vmatmul.f32.gmra.mxu0 %v1098
        %v1120 = vpop.f32.mrf.mxu0
        %v1121 = vadd.f32 %v1095, %v1120
        %1122 = vmatmul.f32.gmra.mxu0 %v1101
        %v1123 = vpop.f32.mrf.mxu0
        %v1124 = vadd.f32 %v1096, %v1123
        %1125 = vdwg.mxu0
        %v1126 = vmax.f32 %v1121, 0.0
        %v1127 = vmax.f32 %v1124, 0.0
        %s1128 = scalar_lea.vmem %s3, 32
        %v1129 = vld [vmem:[%s1128] sm:$0xff]
        %v1130 = vld [vmem:[%s1128 + $0x8] sm:$0xff]
        %s1131 = scalar_lea.vmem %s4, 32
        %v1132 = vld [vmem:[%s1131] sm:$0xff]
        %v1133 = vld [vmem:[%s1131 + $0x8] sm:$0x7f]
        %v1135 = vsel %vm1059, %v1126, 0
        %v1138 = vsel %vm1059, %v1127, 0
        %1140 = vmatpush.msra.mxu0 0.0
        %1141 = vmatpush.msra.mxu0 0.0
        %1142 = vmatpush.msra.mxu0 0.0
        %1143 = vmatpush.msra.mxu0 0.0
        %1144 = vmatpush.msra.mxu0 0.0
        %1145 = vmatpush.msra.mxu0 0.0
        %1146 = vmatpush.msra.mxu0 0.0
        %1147 = vmatpush.msra.mxu0 0.0
        %1148 = vmatpush.msra.mxu0 0.0
        %1149 = vmatpush.msra.mxu0 0.0
        %1150 = vmatpush.msra.mxu0 0.0
        %1151 = vmatpush.msra.mxu0 0.0
        %1152 = vmatpush.msra.mxu0 0.0
        %1153 = vmatpush.msra.mxu0 0.0
        %1154 = vmatpush.msra.mxu0 %v1130
        %1155 = vmatpush.msra.mxu0 %v1129
        %1156 = vmatmul.f32.gmra.mxu0 %v1135
        %v1157 = vpop.f32.mrf.mxu0
        %v1158 = vadd.f32 %v1132, %v1157
        %1159 = vmatmul.f32.gmra.mxu0 %v1138
        %v1160 = vpop.f32.mrf.mxu0
        %v1161 = vadd.f32 %v1133, %v1160
        %1162 = vdwg.mxu0
        %v1163 = vmax.f32 %v1158, 0.0
        %v1164 = vmax.f32 %v1161, 0.0
        %s1165 = scalar_lea.vmem %s3, 48
        %v1166 = vld [vmem:[%s1165] sm:$0xff]
        %v1167 = vld [vmem:[%s1165 + $0x8] sm:$0xff]
        %s1168 = scalar_lea.vmem %s4, 48
        %v1169 = vld [vmem:[%s1168] sm:$0xff]
        %v1170 = vld [vmem:[%s1168 + $0x8] sm:$0x7f]
        %v1172 = vsel %vm1059, %v1163, 0
        %v1175 = vsel %vm1059, %v1164, 0
        %1177 = vmatpush.msra.mxu0 0.0
        %1178 = vmatpush.msra.mxu0 0.0
        %1179 = vmatpush.msra.mxu0 0.0
        %1180 = vmatpush.msra.mxu0 0.0
        %1181 = vmatpush.msra.mxu0 0.0
        %1182 = vmatpush.msra.mxu0 0.0
        %1183 = vmatpush.msra.mxu0 0.0
        %1184 = vmatpush.msra.mxu0 0.0
        %1185 = vmatpush.msra.mxu0 0.0
        %1186 = vmatpush.msra.mxu0 0.0
        %1187 = vmatpush.msra.mxu0 0.0
        %1188 = vmatpush.msra.mxu0 0.0
        %1189 = vmatpush.msra.mxu0 0.0
        %1190 = vmatpush.msra.mxu0 0.0
        %1191 = vmatpush.msra.mxu0 %v1167
        %1192 = vmatpush.msra.mxu0 %v1166
        %1193 = vmatmul.f32.gmra.mxu0 %v1172
        %v1194 = vpop.f32.mrf.mxu0
        %v1195 = vadd.f32 %v1169, %v1194
        %1196 = vmatmul.f32.gmra.mxu0 %v1175
        %v1197 = vpop.f32.mrf.mxu0
        %v1198 = vadd.f32 %v1170, %v1197
        %1199 = vdwg.mxu0
        %v1200 = vmax.f32 %v1195, 0.0
        %v1201 = vmax.f32 %v1198, 0.0
        %s1202 = scalar_lea.vmem %s3, 64
        %v1203 = vld [vmem:[%s1202] sm:$0xff]
        %v1204 = vld [vmem:[%s1202 + $0x8] sm:$0xff]
        %s1205 = scalar_lea.vmem %s4, 64
        %v1206 = vld [vmem:[%s1205] sm:$0xff]
        %v1207 = vld [vmem:[%s1205 + $0x8] sm:$0x7f]
        %v1209 = vsel %vm1059, %v1200, 0
        %v1212 = vsel %vm1059, %v1201, 0
        %1214 = vmatpush.msra.mxu0 0.0
        %1215 = vmatpush.msra.mxu0 0.0
        %1216 = vmatpush.msra.mxu0 0.0
        %1217 = vmatpush.msra.mxu0 0.0
        %1218 = vmatpush.msra.mxu0 0.0
        %1219 = vmatpush.msra.mxu0 0.0
        %1220 = vmatpush.msra.mxu0 0.0
        %1221 = vmatpush.msra.mxu0 0.0
        %1222 = vmatpush.msra.mxu0 0.0
        %1223 = vmatpush.msra.mxu0 0.0
        %1224 = vmatpush.msra.mxu0 0.0
        %1225 = vmatpush.msra.mxu0 0.0
        %1226 = vmatpush.msra.mxu0 0.0
        %1227 = vmatpush.msra.mxu0 0.0
        %1228 = vmatpush.msra.mxu0 %v1204
        %1229 = vmatpush.msra.mxu0 %v1203
        %1230 = vmatmul.f32.gmra.mxu0 %v1209
        %v1231 = vpop.f32.mrf.mxu0
        %v1232 = vadd.f32 %v1206, %v1231
        %1233 = vmatmul.f32.gmra.mxu0 %v1212
        %v1234 = vpop.f32.mrf.mxu0
        %v1235 = vadd.f32 %v1207, %v1234
        %1236 = vdwg.mxu0
        %v1237 = vmax.f32 %v1232, 0.0
        %v1238 = vmax.f32 %v1235, 0.0
        %s1239 = scalar_lea.vmem %s3, 80
        %v1240 = vld [vmem:[%s1239] sm:$0xff]
        %v1241 = vld [vmem:[%s1239 + $0x8] sm:$0xff]
        %s1242 = scalar_lea.vmem %s4, 80
        %v1243 = vld [vmem:[%s1242] sm:$0xff]
        %v1244 = vld [vmem:[%s1242 + $0x8] sm:$0x7f]
        %v1246 = vsel %vm1059, %v1237, 0
        %v1249 = vsel %vm1059, %v1238, 0
        %1251 = vmatpush.msra.mxu0 0.0
        %1252 = vmatpush.msra.mxu0 0.0
        %1253 = vmatpush.msra.mxu0 0.0
        %1254 = vmatpush.msra.mxu0 0.0
        %1255 = vmatpush.msra.mxu0 0.0
        %1256 = vmatpush.msra.mxu0 0.0
        %1257 = vmatpush.msra.mxu0 0.0
        %1258 = vmatpush.msra.mxu0 0.0
        %1259 = vmatpush.msra.mxu0 0.0
        %1260 = vmatpush.msra.mxu0 0.0
        %1261 = vmatpush.msra.mxu0 0.0
        %1262 = vmatpush.msra.mxu0 0.0
        %1263 = vmatpush.msra.mxu0 0.0
        %1264 = vmatpush.msra.mxu0 0.0
        %1265 = vmatpush.msra.mxu0 %v1241
        %1266 = vmatpush.msra.mxu0 %v1240
        %1267 = vmatmul.f32.gmra.mxu0 %v1246
        %v1268 = vpop.f32.mrf.mxu0
        %v1269 = vadd.f32 %v1243, %v1268
        %1270 = vmatmul.f32.gmra.mxu0 %v1249
        %v1271 = vpop.f32.mrf.mxu0
        %v1272 = vadd.f32 %v1244, %v1271
        %1273 = vdwg.mxu0
        %v1274 = vmax.f32 %v1269, 0.0
        %v1275 = vmax.f32 %v1272, 0.0
        %s1276 = scalar_lea.vmem %s3, 96
        %v1277 = vld [vmem:[%s1276] sm:$0xff]
        %v1278 = vld [vmem:[%s1276 + $0x8] sm:$0xff]
        %s1279 = scalar_lea.vmem %s4, 96
        %v1280 = vld [vmem:[%s1279] sm:$0xff]
        %v1281 = vld [vmem:[%s1279 + $0x8] sm:$0x7f]
        %v1283 = vsel %vm1059, %v1274, 0
        %v1286 = vsel %vm1059, %v1275, 0
        %1288 = vmatpush.msra.mxu0 0.0
        %1289 = vmatpush.msra.mxu0 0.0
        %1290 = vmatpush.msra.mxu0 0.0
        %1291 = vmatpush.msra.mxu0 0.0
        %1292 = vmatpush.msra.mxu0 0.0
        %1293 = vmatpush.msra.mxu0 0.0
        %1294 = vmatpush.msra.mxu0 0.0
        %1295 = vmatpush.msra.mxu0 0.0
        %1296 = vmatpush.msra.mxu0 0.0
        %1297 = vmatpush.msra.mxu0 0.0
        %1298 = vmatpush.msra.mxu0 0.0
        %1299 = vmatpush.msra.mxu0 0.0
        %1300 = vmatpush.msra.mxu0 0.0
        %1301 = vmatpush.msra.mxu0 0.0
        %1302 = vmatpush.msra.mxu0 %v1278
        %1303 = vmatpush.msra.mxu0 %v1277
        %1304 = vmatmul.f32.gmra.mxu0 %v1283
        %v1305 = vpop.f32.mrf.mxu0
        %v1306 = vadd.f32 %v1280, %v1305
        %1307 = vmatmul.f32.gmra.mxu0 %v1286
        %v1308 = vpop.f32.mrf.mxu0
        %v1309 = vadd.f32 %v1281, %v1308
        %1310 = vdwg.mxu0
        %v1311 = vmax.f32 %v1306, 0.0
        %v1312 = vmax.f32 %v1309, 0.0
        %s1313 = scalar_lea.vmem %s3, 112
        %v1314 = vld [vmem:[%s1313] sm:$0xff]
        %v1315 = vld [vmem:[%s1313 + $0x8] sm:$0xff]
        %s1316 = scalar_lea.vmem %s4, 112
        %v1317 = vld [vmem:[%s1316] sm:$0xff]
        %v1318 = vld [vmem:[%s1316 + $0x8] sm:$0x7f]
        %v1320 = vsel %vm1059, %v1311, 0
        %v1323 = vsel %vm1059, %v1312, 0
        %1325 = vmatpush.msra.mxu0 0.0
        %1326 = vmatpush.msra.mxu0 0.0
        %1327 = vmatpush.msra.mxu0 0.0
        %1328 = vmatpush.msra.mxu0 0.0
        %1329 = vmatpush.msra.mxu0 0.0
        %1330 = vmatpush.msra.mxu0 0.0
        %1331 = vmatpush.msra.mxu0 0.0
        %1332 = vmatpush.msra.mxu0 0.0
        %1333 = vmatpush.msra.mxu0 0.0
        %1334 = vmatpush.msra.mxu0 0.0
        %1335 = vmatpush.msra.mxu0 0.0
        %1336 = vmatpush.msra.mxu0 0.0
        %1337 = vmatpush.msra.mxu0 0.0
        %1338 = vmatpush.msra.mxu0 0.0
        %1339 = vmatpush.msra.mxu0 %v1315
        %1340 = vmatpush.msra.mxu0 %v1314
        %1341 = vmatmul.f32.gmra.mxu0 %v1320
        %v1342 = vpop.f32.mrf.mxu0
        %v1343 = vadd.f32 %v1317, %v1342
        %1344 = vmatmul.f32.gmra.mxu0 %v1323
        %v1345 = vpop.f32.mrf.mxu0
        %v1346 = vadd.f32 %v1318, %v1345
        %1347 = vdwg.mxu0
        %v1348 = vxor.u32 %v1343, 2147483648
        %v1349 = vxor.u32 %v1346, 2147483648
        %v1350 = vmul.f32 %v1348, 1.442695
        %v1351 = vpow.pop %v1350
        %v1352 = vmul.f32 %v1349, 1.442695
        %v1353 = vpow.pop %v1352
        %v1354 = vadd.f32 %v1351, 1.0
        %v1355 = vadd.f32 %v1353, 1.0
        %v1356 = vrcp.pop %v1354
        %v1357 = vmul.f32 %v1354, %v1356
        %v1358 = vsub.f32 1.0, %v1357
        %v1359 = vmul.f32 %v1356, %v1358
        %v1360 = vadd.f32 %v1356, %v1359
        %vm1361 = vweird.f32 %v1354
        %vm1362 = vweird.f32 %v1356
        %vm1363 = vmor %vm1361, %vm1362
        %v1364 = vsel %vm1363, %v1356, %v1360
        %v1365 = vand.u32 2147483647, %v1354
        %vm1366 = vcmp.eq.f32.partialorder %v1365, 8.507059e+37
        %v1367 = vand.u32 %v1354, 2147483648
        %v1368 = vor.u32 1.1754944e-38, %v1367
        %v1369 = vsel %vm1366, %v1368, %v1364
        %v1370 = vmul.f32 1.0, %v1369
        %v1371 = vrcp.pop %v1355
        %v1372 = vmul.f32 %v1355, %v1371
        %v1373 = vsub.f32 1.0, %v1372
        %v1374 = vmul.f32 %v1371, %v1373
        %v1375 = vadd.f32 %v1371, %v1374
        %vm1376 = vweird.f32 %v1355
        %vm1377 = vweird.f32 %v1371
        %vm1378 = vmor %vm1376, %vm1377
        %v1379 = vsel %vm1378, %v1371, %v1375
        %v1380 = vand.u32 2147483647, %v1355
        %vm1381 = vcmp.eq.f32.partialorder %v1380, 8.507059e+37
        %v1382 = vand.u32 %v1355, 2147483648
        %v1383 = vor.u32 1.1754944e-38, %v1382
        %v1384 = vsel %vm1381, %v1383, %v1379
        %v1385 = vmul.f32 1.0, %v1384
        %s1386 = scalar_lea.vmem %s4, 128
        %v1387 = vld [vmem:[%s1386] sm:$0xff]
        %v1388 = vld [vmem:[%s1386 + $0x8] sm:$0x7f]
        %v1389 = vadd.f32 %v1370, %v1387
        %v1390 = vadd.f32 %v1385, %v1388
        %1391 = vst.msk [vmem:[%s241] sm:$0xff] %vm1059, %v1389
        %vm1392 = vcmask 129024
        %1393 = vst.msk [vmem:[%s241 + $0x8] sm:$0x7f] %vm1392, %v1390
        %p1394 = scmp.lt.s32.totalorder %s17, 1
        %s1395 = scalar_select %p1394, %s17, 1
        %s1396 = smul.addr %s1395, 2
        %s1397 = smul.addr %s1396, 8
        %s1398 = scalar_lea.vmem %s5, %s1397
        // Predicated region
        $region45: #{freq_conv_proposal_single_side.1} parent=39 // pred_check
          %p1399 = pneg %p145
        $region46: #{freq_conv_proposal_single_side.1} parent=39 // pred_check_branch
          %1401 = sbr.rel (%p1399) target = $region48
        $region47: #{freq_conv_proposal_single_side.1} parent=39 // pred_region
          _
        $region48: #{freq_conv_proposal_single_side.1} parent=39 // pred_fallthru
          _
      $region40: #{freq_conv_proposal_single_side.1} parent=5 // pred_fallthru
        _
      %p1402 = scmp.le.s32.totalorder 2, %s12
      // Predicated region
      $region49: #{freq_conv_proposal_single_side.1} parent=5 // pred_check
        %p1403 = pneg %p1402
      $region50: #{freq_conv_proposal_single_side.1} parent=5 // pred_check_branch
        %1405 = sbr.rel (%p1403) target = $region52
      $region51: #{freq_conv_proposal_single_side.1} parent=5 // pred_region
        %s1406 = ssub.s32 %s12, 2
        // Predicated region
        $region53: #{freq_conv_proposal_single_side.1} parent=51 // pred_check
          %p1407 = pneg %p151
        $region54: #{freq_conv_proposal_single_side.1} parent=51 // pred_check_branch
          %1409 = sbr.rel (%p1407) target = $region56
        $region55: #{freq_conv_proposal_single_side.1} parent=51 // pred_region
          %p1410 = scmp.lt.s32.totalorder %s18, 1
          %s1411 = scalar_select %p1410, %s18, 1
          %s1412 = smul.addr %s1411, 2
          %s1413 = smul.addr %s1412, 8
          %s1414 = scalar_lea.vmem %s5, %s1413
        $region56: #{freq_conv_proposal_single_side.1} parent=51 // pred_fallthru
          _
      $region52: #{freq_conv_proposal_single_side.1} parent=5 // pred_fallthru
        _
    $region6: #{freq_conv_proposal_single_side.1} parent=1 // loop_footer
      %s16 = sadd.s32 1, %s12
    $region7: #{freq_conv_proposal_single_side.1} parent=1 // loop_footer_branch
      %11 = sbr.rel target = $region3
    $region8: #{freq_conv_proposal_single_side.1} parent=1 // loop_exit
      _
    %1415 = vsyncpa [#allocation3], 1
    %s1416 = scalar_lea.sflag [#allocation3], 1
    %1417 = vsyncpa %s1416, 1

</llo_original>
